<compile_context>
chip_gen: v7x
topology: tpu7x:2x2x1
jax: 0.10.0
libtpu: 0.0.40
codegen_flags: <defaults>
</compile_context>

<pallas_src>
import math
from functools import partial

import jax
import jax.numpy as jnp
from jax import lax
from jax.experimental import pallas as pl
from jax.experimental.pallas import tpu as pltpu

# ----------------- configuration (mirrors RoIHeads.__init__ args) -----------------
NUM_CLASSES = 3               # background + 2 foreground classes
POOL = 7                      # box_roi_pool output resolution
SAMPLING_RATIO = 2            # must be >= 1 (separable RoIAlign needs a fixed grid)
SPATIAL_SCALE = 1.0
MID_CHANNELS = 32             # box_predictor hidden width
REG_WEIGHTS = (10.0, 10.0, 5.0, 5.0)
SCORE_THRESH = 0.05
NMS_THRESH = 0.5
NUM_DETECTIONS = 4
MIN_SIZE = 1.0
BBOX_CLIP = math.log(1000.0 / 16.0)
ROI_BLOCK = 8                 # ROIs per grid step (multiple of 8 => sublane-aligned blocks)

assert SAMPLING_RATIO >= 1, "separable RoIAlign requires a fixed tensor-product sample grid"


# ===================== RoIAlign interpolation weights (wrapper, XLA) ================
def _axis_interp_weights(start, end, out_size, sr, size):
    """Separable bilinear-RoIAlign weights, averaged over sampling points per bin
    (torchvision aligned=False semantics).  Returns (N, out_size, size) f32."""
    length = jnp.maximum(end - start, 1.0)
    bin_sz = length / out_size                                     # (N,)
    p = jnp.arange(out_size, dtype=jnp.float32)                    # (out,)
    s = (jnp.arange(sr, dtype=jnp.float32) + 0.5) / sr             # (sr,)
    pos = start[:, None, None] + (p[None, :, None] + s[None, None, :]) * bin_sz[:, None, None]
    valid = (pos >= -1.0) & (pos <= float(size))
    pos = jnp.maximum(pos, 0.0)
    low = jnp.floor(pos)
    at_edge = low >= size - 1
    low = jnp.where(at_edge, float(size - 1), low)
    high = jnp.where(at_edge, float(size - 1), low + 1.0)
    pos = jnp.where(at_edge, float(size - 1), pos)
    l_w = pos - low
    h_w = 1.0 - l_w
    grid = jnp.arange(size, dtype=jnp.float32)
    w = (h_w[..., None] * (grid == low[..., None])
         + l_w[..., None] * (grid == high[..., None]))
    w = w * valid[..., None]
    return w.mean(axis=2).astype(jnp.float32)                      # (N, out, size)


def _build_kron_weights(proposals, H, W):
    """Combined bilinear weight kron(Ay, Ax): (n, POOL*POOL, H*W) so that
    pooled[i, py*POOL+px, c] = sum_{y,x} Ay[i,py,y] Ax[i,px,x] F[c,y,x]."""
    x1 = proposals[:, 0] * SPATIAL_SCALE
    y1 = proposals[:, 1] * SPATIAL_SCALE
    x2 = proposals[:, 2] * SPATIAL_SCALE
    y2 = proposals[:, 3] * SPATIAL_SCALE
    ay = _axis_interp_weights(y1, y2, POOL, SAMPLING_RATIO, H)     # (n, 7, H)
    ax = _axis_interp_weights(x1, x2, POOL, SAMPLING_RATIO, W)     # (n, 7, W)
    kron = ay[:, :, None, :, None] * ax[:, None, :, None, :]       # (n,7,7,H,W)
    return kron.reshape(proposals.shape[0], POOL * POOL, H * W)


# ============================ RoIAlign (Pallas) ====================================
def _roi_align_kernel(kron_ref, f2_ref, out_ref):
    # kron_ref: (B, 49, H*W)   f2_ref: (H*W, C)   out_ref: (B, 49, C)
    f2 = f2_ref[...]
    for b in range(out_ref.shape[0]):            # small static ROI loop inside block
        out_ref[b] = jnp.dot(kron_ref[b], f2, preferred_element_type=jnp.float32)


def roi_align_kron(feature_chw, kron):
    C, H, W = feature_chw.shape
    n_pad = kron.shape[0]                        # multiple of ROI_BLOCK
    f2 = feature_chw.transpose(1, 2, 0).reshape(H * W, C)          # row = y*W + x
    return pl.pallas_call(
        _roi_align_kernel,
        out_shape=jax.ShapeDtypeStruct((n_pad, POOL * POOL, C), jnp.float32),
        grid=(n_pad // ROI_BLOCK,),
        in_specs=[
            pl.BlockSpec((ROI_BLOCK, POOL * POOL, H * W), lambda i: (i, 0, 0)),
            pl.BlockSpec((H * W, C), lambda i: (0, 0)),
        ],
        out_specs=pl.BlockSpec((ROI_BLOCK, POOL * POOL, C), lambda i: (i, 0, 0)),
        compiler_params=pltpu.CompilerParams(dimension_semantics=("parallel",)),
    )(kron, f2)


# ============ Fused box_predictor + softmax + BoxCoder.decode + clip (Pallas) ======
def _make_head_kernel(img_h, img_w):
    rw_x, rw_y, rw_w, rw_h = REG_WEIGHTS
    K = NUM_CLASSES

    def kernel(x_ref, prop_ref, w1_ref, b1_ref, w2_ref, b2_ref, whd_ref, bhd_ref, det_ref):
        # x_ref: (B, 49*C)  prop_ref: (B, 4)  whd: (MID, 5K)  det_ref: (5, B, K)
        h = jnp.maximum(
            jnp.dot(x_ref[...], w1_ref[...], preferred_element_type=jnp.float32) + b1_ref[...], 0.0)
        h = jnp.maximum(
            jnp.dot(h, w2_ref[...], preferred_element_type=jnp.float32) + b2_ref[...], 0.0)
        out = jnp.dot(h, whd_ref[...], preferred_element_type=jnp.float32) + bhd_ref[...]   # (B, 5K)

        # softmax over class logits
        logit = out[:, :K]
        m = jnp.max(logit, axis=-1, keepdims=True)
        e = jnp.exp(logit - m)
        score = e / jnp.sum(e, axis=-1, keepdims=True)

        # BoxCoder.decode (deltas arrive pre-permuted into [dx|dy|dw|dh] K-wide blocks)
        p = prop_ref[...]                                   # (B, 4)
        pw = p[:, 2:3] - p[:, 0:1]
        ph = p[:, 3:4] - p[:, 1:2]
        cx = p[:, 0:1] + 0.5 * pw
        cy = p[:, 1:2] + 0.5 * ph

        dx = out[:, K:2 * K] / rw_x
        dy = out[:, 2 * K:3 * K] / rw_y
        dw = jnp.minimum(out[:, 3 * K:4 * K] / rw_w, BBOX_CLIP)
        dh = jnp.minimum(out[:, 4 * K:5 * K] / rw_h, BBOX_CLIP)

        pcx = dx * pw + cx
        pcy = dy * ph + cy
        qw = jnp.exp(dw) * pw
        qh = jnp.exp(dh) * ph

        det_ref[0] = score
        det_ref[1] = jnp.clip(pcx - 0.5 * qw, 0.0, img_w)
        det_ref[2] = jnp.clip(pcy - 0.5 * qh, 0.0, img_h)
        det_ref[3] = jnp.clip(pcx + 0.5 * qw, 0.0, img_w)
        det_ref[4] = jnp.clip(pcy + 0.5 * qh, 0.0, img_h)

    return kernel


def fused_box_head(flat, proposals_pad, params, image_shape):
    n_pad, feat_dim = flat.shape
    K = NUM_CLASSES
    C = params["w1"].shape[0] // (POOL * POOL)

    # w1 is given in torch channel-major flatten order (c*49 + p); our pooled flatten is
    # position-major (p*C + c), so permute rows once (wrapper, free):
    w1 = params["w1"].reshape(C, POOL * POOL, MID_CHANNELS) \
                     .transpose(1, 0, 2).reshape(POOL * POOL * C, MID_CHANNELS)
    # bbox weights given class-major (l*4+t); permute columns to [dx|dy|dw|dh] blocks:
    wb = params["wb"].reshape(MID_CHANNELS, K, 4).transpose(0, 2, 1).reshape(MID_CHANNELS, 4 * K)
    bb = params["bb"].reshape(1, K, 4).transpose(0, 2, 1).reshape(1, 4 * K)
    w_head = jnp.concatenate([params["wc"], wb], axis=1)           # (MID, 5K)
    b_head = jnp.concatenate([params["bc"], bb], axis=1)           # (1, 5K)

    b1, w2, b2 = params["b1"], params["w2"], params["b2"]
    det = pl.pallas_call(
        _make_head_kernel(float(image_shape[0]), float(image_shape[1])),
        out_shape=jax.ShapeDtypeStruct((5, n_pad, K), jnp.float32),
        grid=(n_pad // ROI_BLOCK,),
        in_specs=[
            pl.BlockSpec((ROI_BLOCK, feat_dim), lambda i: (i, 0)),
            pl.BlockSpec((ROI_BLOCK, 4), lambda i: (i, 0)),
            pl.BlockSpec(w1.shape, lambda i: (0, 0)),
            pl.BlockSpec(b1.shape, lambda i: (0, 0)),
            pl.BlockSpec(w2.shape, lambda i: (0, 0)),
            pl.BlockSpec(b2.shape, lambda i: (0, 0)),
            pl.BlockSpec(w_head.shape, lambda i: (0, 0)),
            pl.BlockSpec(b_head.shape, lambda i: (0, 0)),
        ],
        out_specs=pl.BlockSpec((5, ROI_BLOCK, K), lambda i: (0, i, 0)),
        compiler_params=pltpu.CompilerParams(dimension_semantics=("parallel",)),
    )(flat, proposals_pad, w1, b1, w2, b2, w_head, b_head)
    return det                                                      # (5, n_pad, K)


# ================= fixed-size masked NMS / filtering (plain JAX glue) ==============
# TODO(synk): PyTorch returns dynamically-sized per-class results; we emit fixed
#             NUM_DETECTIONS slots per class with a `valid` mask instead.
def _pairwise_iou(b):
    area = (b[:, 2] - b[:, 0]) * (b[:, 3] - b[:, 1])
    x1 = jnp.maximum(b[:, None, 0], b[None, :, 0])
    y1 = jnp.maximum(b[:, None, 1], b[None, :, 1])
    x2 = jnp.minimum(b[:, None, 2], b[None, :, 2])
    y2 = jnp.minimum(b[:, None, 3], b[None, :, 3])
    inter = jnp.clip(x2 - x1, 0.0) * jnp.clip(y2 - y1, 0.0)
    return inter / (area[:, None] + area[None, :] - inter + 1e-12)


def _nms_topk(boxes, scores, valid):
    """Greedy NMS with a precomputed IoU matrix; vmapped over classes."""
    n = boxes.shape[0]
    order = jnp.argsort(jnp.where(valid, -scores, jnp.inf))
    b = boxes[order]
    s = scores[order]
    v = valid[order]
    iou = _pairwise_iou(b)                                          # (n, n), once

    def body(i, keep):
        suppressed = jnp.any(keep & (iou[i] > NMS_THRESH))
        return keep.at[i].set(v[i] & jnp.logical_not(suppressed))

    keep = lax.fori_loop(0, n, body, jnp.zeros((n,), dtype=bool))
    rank = jnp.cumsum(keep.astype(jnp.int32)) - 1
    sel = keep & (rank < NUM_DETECTIONS)
    slot = jnp.where(sel, rank, NUM_DETECTIONS)
    out_b = jnp.zeros((NUM_DETECTIONS + 1, 4), b.dtype).at[slot].set(b)[:NUM_DETECTIONS]
    out_s = jnp.zeros((NUM_DETECTIONS + 1,), s.dtype).at[slot].set(s)[:NUM_DETECTIONS]
    out_v = jnp.zeros((NUM_DETECTIONS + 1,), bool).at[slot].set(sel)[:NUM_DETECTIONS]
    return out_b, out_s, out_v


# ================================ full forward =====================================
def roi_heads_forward(feature_nchw, proposals, params, image_shape):
    feature = feature_nchw[0]                                       # CHW (batch=1)
    C, H, W = feature.shape
    n = proposals.shape[0]
    K = NUM_CLASSES

    # pad ROI count to a multiple of ROI_BLOCK (padded rows are sliced off below)
    pad = (-n) % ROI_BLOCK
    prop_pad = jnp.pad(proposals, ((0, pad), (0, 0)))

    kron = _build_kron_weights(prop_pad, H, W)                      # (n_pad, 49, H*W)
    pooled = roi_align_kron(feature, kron)                          # (n_pad, 49, C)
    flat = pooled.reshape(prop_pad.shape[0], POOL * POOL * C)       # position-major flatten
    det = fused_box_head(flat, prop_pad, params, image_shape)       # (5, n_pad, K)

    scores = det[0, :n]                                             # (n, K)
    boxes = jnp.stack([det[1], det[2], det[3], det[4]], axis=-1)[:n]  # (n, K, 4)

    # per-class filtering + NMS, vectorized over foreground classes
    scores_fg = scores[:, 1:].T                                     # (K-1, n)
    boxes_fg = jnp.transpose(boxes[:, 1:, :], (1, 0, 2))            # (K-1, n, 4)
    bw = boxes_fg[..., 2] - boxes_fg[..., 0]
    bh = boxes_fg[..., 3] - boxes_fg[..., 1]
    valid = (scores_fg >= SCORE_THRESH) & (bw >= MIN_SIZE) & (bh >= MIN_SIZE)
    kb, ks, kv = jax.vmap(_nms_topk)(boxes_fg, scores_fg, valid)    # (K-1, topk, ...)

    labels = jnp.broadcast_to(jnp.arange(1, K, dtype=jnp.int32)[:, None],
                              (K - 1, NUM_DETECTIONS))
    result = dict(boxes=kb.reshape(-1, 4),
                  scores=ks.reshape(-1),
                  labels=labels.reshape(-1),
                  valid=kv.reshape(-1))
    losses = {}
    return result, losses


# ==================================== main =========================================
if __name__ == "__main__":
    key = jax.random.PRNGKey(0)
    kf, kp1, kp2, kw = jax.random.split(key, 4)

    C, H, W = 4, 16, 16
    N = 16                                    # 16 ROIs -> grid=(2,) (both TCs on v7x)
    image_shape = (16, 16)                    # (height, width)

    feature = jax.random.normal(kf, (1, C, H, W), jnp.float32)      # NCHW
    xy = jax.random.uniform(kp1, (N, 2), minval=0.0, maxval=8.0)
    wh = jax.random.uniform(kp2, (N, 2), minval=3.0, maxval=7.0)
    proposals = jnp.concatenate([xy, xy + wh], axis=1).astype(jnp.float32)

    feat_dim = C * POOL * POOL
    ks = jax.random.split(kw, 4)

    def lin(k, fin, fout):
        return (jax.random.normal(k, (fin, fout), jnp.float32) * 0.01,
                jnp.zeros((1, fout), jnp.float32))

    w1, b1 = lin(ks[0], feat_dim, MID_CHANNELS)       # torch channel-major flatten layout
    w2, b2 = lin(ks[1], MID_CHANNELS, MID_CHANNELS)
    wc, bc = lin(ks[2], MID_CHANNELS, NUM_CLASSES)
    wb, bb = lin(ks[3], MID_CHANNELS, NUM_CLASSES * 4)
    params = dict(w1=w1, b1=b1, w2=w2, b2=b2, wc=wc, bc=bc, wb=wb, bb=bb)

    fwd = jax.jit(partial(roi_heads_forward, image_shape=image_shape))
    result, losses = fwd(feature, proposals, params)
    jax.block_until_ready(result["boxes"])
    jax.block_until_ready(result["scores"])
    jax.block_until_ready(result["labels"])
    print("KERNEL_OK")
</pallas_src>

<mosaic_0001>
module attributes {stable_mosaic.version = 11 : i64} {
  func.func @_roi_align_kernel(%arg0: i32, %arg1: memref<8x49x256xf32, #tpu.memory_space<vmem>>, %arg2: memref<256x4xf32, #tpu.memory_space<vmem>>, %arg3: memref<8x49x4xf32, #tpu.memory_space<vmem>>) attributes {dimension_semantics = [#tpu.dimension_semantics<parallel>], iteration_bounds = array<i64: 2>, scalar_prefetch = 0 : i64, scratch_operands = 0 : i64, tpu.core_type = #tpu.core_type<tc>, window_params = [{transform_indices = @transform_0, window_bounds = array<i64: 8, 49, 256>}, {pipeline_mode = #tpu.pipeline_mode<synchronous>, transform_indices = @transform_1, window_bounds = array<i64: 256, 4>}, {transform_indices = @transform_2, window_bounds = array<i64: 8, 49, 4>}]} {
    %c0 = arith.constant 0 : index
    %c0_0 = arith.constant 0 : index
    %0 = vector.load %arg2[%c0, %c0_0] : memref<256x4xf32, #tpu.memory_space<vmem>>, vector<256x4xf32>
    %c0_1 = arith.constant 0 : index
    %c0_2 = arith.constant 0 : index
    %c0_3 = arith.constant 0 : index
    %1 = vector.load %arg1[%c0_1, %c0_2, %c0_3] : memref<8x49x256xf32, #tpu.memory_space<vmem>>, vector<1x49x256xf32>
    %2 = vector.shape_cast %1 : vector<1x49x256xf32> to vector<49x256xf32>
    %cst = arith.constant dense<0.000000e+00> : vector<49x4xf32>
    %3 = tpu.matmul %2, %0, %cst {dimension_numbers = #tpu.dot_dimension_numbers<[1], [0], [0], [1], [0, 0, 1, 1], [], []>} : vector<49x256xf32>, vector<256x4xf32>, vector<49x4xf32> -> vector<49x4xf32>
    %c0_4 = arith.constant 0 : index
    %c0_5 = arith.constant 0 : index
    %c0_6 = arith.constant 0 : index
    %4 = vector.load %arg3[%c0_4, %c0_5, %c0_6] : memref<8x49x4xf32, #tpu.memory_space<vmem>>, vector<1x49x4xf32>
    %5 = vector.shape_cast %4 : vector<1x49x4xf32> to vector<49x4xf32>
    %6 = vector.shape_cast %3 : vector<49x4xf32> to vector<1x49x4xf32>
    tpu.vector_store %arg3[%c0_4, %c0_5, %c0_6], %6 {strides = array<i32>} : memref<8x49x4xf32, #tpu.memory_space<vmem>>, vector<1x49x4xf32>,
    %c1 = arith.constant 1 : index
    %c0_7 = arith.constant 0 : index
    %c0_8 = arith.constant 0 : index
    %7 = vector.load %arg1[%c1, %c0_7, %c0_8] : memref<8x49x256xf32, #tpu.memory_space<vmem>>, vector<1x49x256xf32>
    %8 = vector.shape_cast %7 : vector<1x49x256xf32> to vector<49x256xf32>
    %cst_9 = arith.constant dense<0.000000e+00> : vector<49x4xf32>
    %9 = tpu.matmul %8, %0, %cst_9 {dimension_numbers = #tpu.dot_dimension_numbers<[1], [0], [0], [1], [0, 0, 1, 1], [], []>} : vector<49x256xf32>, vector<256x4xf32>, vector<49x4xf32> -> vector<49x4xf32>
    %c1_10 = arith.constant 1 : index
    %c0_11 = arith.constant 0 : index
    %c0_12 = arith.constant 0 : index
    %10 = vector.load %arg3[%c1_10, %c0_11, %c0_12] : memref<8x49x4xf32, #tpu.memory_space<vmem>>, vector<1x49x4xf32>
    %11 = vector.shape_cast %10 : vector<1x49x4xf32> to vector<49x4xf32>
    %12 = vector.shape_cast %9 : vector<49x4xf32> to vector<1x49x4xf32>
    tpu.vector_store %arg3[%c1_10, %c0_11, %c0_12], %12 {strides = array<i32>} : memref<8x49x4xf32, #tpu.memory_space<vmem>>, vector<1x49x4xf32>,
    %c2 = arith.constant 2 : index
    %c0_13 = arith.constant 0 : index
    %c0_14 = arith.constant 0 : index
    %13 = vector.load %arg1[%c2, %c0_13, %c0_14] : memref<8x49x256xf32, #tpu.memory_space<vmem>>, vector<1x49x256xf32>
    %14 = vector.shape_cast %13 : vector<1x49x256xf32> to vector<49x256xf32>
    %cst_15 = arith.constant dense<0.000000e+00> : vector<49x4xf32>
    %15 = tpu.matmul %14, %0, %cst_15 {dimension_numbers = #tpu.dot_dimension_numbers<[1], [0], [0], [1], [0, 0, 1, 1], [], []>} : vector<49x256xf32>, vector<256x4xf32>, vector<49x4xf32> -> vector<49x4xf32>
    %c2_16 = arith.constant 2 : index
    %c0_17 = arith.constant 0 : index
    %c0_18 = arith.constant 0 : index
    %16 = vector.load %arg3[%c2_16, %c0_17, %c0_18] : memref<8x49x4xf32, #tpu.memory_space<vmem>>, vector<1x49x4xf32>
    %17 = vector.shape_cast %16 : vector<1x49x4xf32> to vector<49x4xf32>
    %18 = vector.shape_cast %15 : vector<49x4xf32> to vector<1x49x4xf32>
    tpu.vector_store %arg3[%c2_16, %c0_17, %c0_18], %18 {strides = array<i32>} : memref<8x49x4xf32, #tpu.memory_space<vmem>>, vector<1x49x4xf32>,
    %c3 = arith.constant 3 : index
    %c0_19 = arith.constant 0 : index
    %c0_20 = arith.constant 0 : index
    %19 = vector.load %arg1[%c3, %c0_19, %c0_20] : memref<8x49x256xf32, #tpu.memory_space<vmem>>, vector<1x49x256xf32>
    %20 = vector.shape_cast %19 : vector<1x49x256xf32> to vector<49x256xf32>
    %cst_21 = arith.constant dense<0.000000e+00> : vector<49x4xf32>
    %21 = tpu.matmul %20, %0, %cst_21 {dimension_numbers = #tpu.dot_dimension_numbers<[1], [0], [0], [1], [0, 0, 1, 1], [], []>} : vector<49x256xf32>, vector<256x4xf32>, vector<49x4xf32> -> vector<49x4xf32>
    %c3_22 = arith.constant 3 : index
    %c0_23 = arith.constant 0 : index
    %c0_24 = arith.constant 0 : index
    %22 = vector.load %arg3[%c3_22, %c0_23, %c0_24] : memref<8x49x4xf32, #tpu.memory_space<vmem>>, vector<1x49x4xf32>
    %23 = vector.shape_cast %22 : vector<1x49x4xf32> to vector<49x4xf32>
    %24 = vector.shape_cast %21 : vector<49x4xf32> to vector<1x49x4xf32>
    tpu.vector_store %arg3[%c3_22, %c0_23, %c0_24], %24 {strides = array<i32>} : memref<8x49x4xf32, #tpu.memory_space<vmem>>, vector<1x49x4xf32>,
    %c4 = arith.constant 4 : index
    %c0_25 = arith.constant 0 : index
    %c0_26 = arith.constant 0 : index
    %25 = vector.load %arg1[%c4, %c0_25, %c0_26] : memref<8x49x256xf32, #tpu.memory_space<vmem>>, vector<1x49x256xf32>
    %26 = vector.shape_cast %25 : vector<1x49x256xf32> to vector<49x256xf32>
    %cst_27 = arith.constant dense<0.000000e+00> : vector<49x4xf32>
    %27 = tpu.matmul %26, %0, %cst_27 {dimension_numbers = #tpu.dot_dimension_numbers<[1], [0], [0], [1], [0, 0, 1, 1], [], []>} : vector<49x256xf32>, vector<256x4xf32>, vector<49x4xf32> -> vector<49x4xf32>
    %c4_28 = arith.constant 4 : index
    %c0_29 = arith.constant 0 : index
    %c0_30 = arith.constant 0 : index
    %28 = vector.load %arg3[%c4_28, %c0_29, %c0_30] : memref<8x49x4xf32, #tpu.memory_space<vmem>>, vector<1x49x4xf32>
    %29 = vector.shape_cast %28 : vector<1x49x4xf32> to vector<49x4xf32>
    %30 = vector.shape_cast %27 : vector<49x4xf32> to vector<1x49x4xf32>
    tpu.vector_store %arg3[%c4_28, %c0_29, %c0_30], %30 {strides = array<i32>} : memref<8x49x4xf32, #tpu.memory_space<vmem>>, vector<1x49x4xf32>,
    %c5 = arith.constant 5 : index
    %c0_31 = arith.constant 0 : index
    %c0_32 = arith.constant 0 : index
    %31 = vector.load %arg1[%c5, %c0_31, %c0_32] : memref<8x49x256xf32, #tpu.memory_space<vmem>>, vector<1x49x256xf32>
    %32 = vector.shape_cast %31 : vector<1x49x256xf32> to vector<49x256xf32>
    %cst_33 = arith.constant dense<0.000000e+00> : vector<49x4xf32>
    %33 = tpu.matmul %32, %0, %cst_33 {dimension_numbers = #tpu.dot_dimension_numbers<[1], [0], [0], [1], [0, 0, 1, 1], [], []>} : vector<49x256xf32>, vector<256x4xf32>, vector<49x4xf32> -> vector<49x4xf32>
    %c5_34 = arith.constant 5 : index
    %c0_35 = arith.constant 0 : index
    %c0_36 = arith.constant 0 : index
    %34 = vector.load %arg3[%c5_34, %c0_35, %c0_36] : memref<8x49x4xf32, #tpu.memory_space<vmem>>, vector<1x49x4xf32>
    %35 = vector.shape_cast %34 : vector<1x49x4xf32> to vector<49x4xf32>
    %36 = vector.shape_cast %33 : vector<49x4xf32> to vector<1x49x4xf32>
    tpu.vector_store %arg3[%c5_34, %c0_35, %c0_36], %36 {strides = array<i32>} : memref<8x49x4xf32, #tpu.memory_space<vmem>>, vector<1x49x4xf32>,
    %c6 = arith.constant 6 : index
    %c0_37 = arith.constant 0 : index
    %c0_38 = arith.constant 0 : index
    %37 = vector.load %arg1[%c6, %c0_37, %c0_38] : memref<8x49x256xf32, #tpu.memory_space<vmem>>, vector<1x49x256xf32>
    %38 = vector.shape_cast %37 : vector<1x49x256xf32> to vector<49x256xf32>
    %cst_39 = arith.constant dense<0.000000e+00> : vector<49x4xf32>
    %39 = tpu.matmul %38, %0, %cst_39 {dimension_numbers = #tpu.dot_dimension_numbers<[1], [0], [0], [1], [0, 0, 1, 1], [], []>} : vector<49x256xf32>, vector<256x4xf32>, vector<49x4xf32> -> vector<49x4xf32>
    %c6_40 = arith.constant 6 : index
    %c0_41 = arith.constant 0 : index
    %c0_42 = arith.constant 0 : index
    %40 = vector.load %arg3[%c6_40, %c0_41, %c0_42] : memref<8x49x4xf32, #tpu.memory_space<vmem>>, vector<1x49x4xf32>
    %41 = vector.shape_cast %40 : vector<1x49x4xf32> to vector<49x4xf32>
    %42 = vector.shape_cast %39 : vector<49x4xf32> to vector<1x49x4xf32>
    tpu.vector_store %arg3[%c6_40, %c0_41, %c0_42], %42 {strides = array<i32>} : memref<8x49x4xf32, #tpu.memory_space<vmem>>, vector<1x49x4xf32>,
    %c7 = arith.constant 7 : index
    %c0_43 = arith.constant 0 : index
    %c0_44 = arith.constant 0 : index
    %43 = vector.load %arg1[%c7, %c0_43, %c0_44] : memref<8x49x256xf32, #tpu.memory_space<vmem>>, vector<1x49x256xf32>
    %44 = vector.shape_cast %43 : vector<1x49x256xf32> to vector<49x256xf32>
    %cst_45 = arith.constant dense<0.000000e+00> : vector<49x4xf32>
    %45 = tpu.matmul %44, %0, %cst_45 {dimension_numbers = #tpu.dot_dimension_numbers<[1], [0], [0], [1], [0, 0, 1, 1], [], []>} : vector<49x256xf32>, vector<256x4xf32>, vector<49x4xf32> -> vector<49x4xf32>
    %c7_46 = arith.constant 7 : index
    %c0_47 = arith.constant 0 : index
    %c0_48 = arith.constant 0 : index
    %46 = vector.load %arg3[%c7_46, %c0_47, %c0_48] : memref<8x49x4xf32, #tpu.memory_space<vmem>>, vector<1x49x4xf32>
    %47 = vector.shape_cast %46 : vector<1x49x4xf32> to vector<49x4xf32>
    %48 = vector.shape_cast %45 : vector<49x4xf32> to vector<1x49x4xf32>
    tpu.vector_store %arg3[%c7_46, %c0_47, %c0_48], %48 {strides = array<i32>} : memref<8x49x4xf32, #tpu.memory_space<vmem>>, vector<1x49x4xf32>,
    return
  }
  func.func @transform_0(%arg0: i32) -> (i32, i32, i32) {
    %c0_i32 = arith.constant 0 : i32
    %c0_i32_0 = arith.constant 0 : i32
    %c0_i32_1 = arith.constant 0 : i32
    return %arg0, %c0_i32, %c0_i32_0 : i32, i32, i32
  }
  func.func @transform_1(%arg0: i32) -> (i32, i32) {
    %c0_i32 = arith.constant 0 : i32
    %c0_i32_0 = arith.constant 0 : i32
    %c0_i32_1 = arith.constant 0 : i32
    return %c0_i32, %c0_i32_0 : i32, i32
  }
  func.func @transform_2(%arg0: i32) -> (i32, i32, i32) {
    %c0_i32 = arith.constant 0 : i32
    %c0_i32_0 = arith.constant 0 : i32
    %c0_i32_1 = arith.constant 0 : i32
    return %arg0, %c0_i32, %c0_i32_0 : i32, i32, i32
  }
}

module attributes {stable_mosaic.version = 11 : i64} {
  func.func @kernel(%arg0: i32, %arg1: memref<8x196xf32, #tpu.memory_space<vmem>>, %arg2: memref<8x4xf32, #tpu.memory_space<vmem>>, %arg3: memref<196x32xf32, #tpu.memory_space<vmem>>, %arg4: memref<1x32xf32, #tpu.memory_space<vmem>>, %arg5: memref<32x32xf32, #tpu.memory_space<vmem>>, %arg6: memref<1x32xf32, #tpu.memory_space<vmem>>, %arg7: memref<32x15xf32, #tpu.memory_space<vmem>>, %arg8: memref<1x15xf32, #tpu.memory_space<vmem>>, %arg9: memref<5x8x3xf32, #tpu.memory_space<vmem>>) attributes {dimension_semantics = [#tpu.dimension_semantics<parallel>], iteration_bounds = array<i64: 2>, scalar_prefetch = 0 : i64, scratch_operands = 0 : i64, tpu.core_type = #tpu.core_type<tc>, window_params = [{transform_indices = @transform_0, window_bounds = array<i64: 8, 196>}, {transform_indices = @transform_1, window_bounds = array<i64: 8, 4>}, {pipeline_mode = #tpu.pipeline_mode<synchronous>, transform_indices = @transform_2, window_bounds = array<i64: 196, 32>}, {pipeline_mode = #tpu.pipeline_mode<synchronous>, transform_indices = @transform_3, window_bounds = array<i64: 1, 32>}, {pipeline_mode = #tpu.pipeline_mode<synchronous>, transform_indices = @transform_4, window_bounds = array<i64: 32, 32>}, {pipeline_mode = #tpu.pipeline_mode<synchronous>, transform_indices = @transform_5, window_bounds = array<i64: 1, 32>}, {pipeline_mode = #tpu.pipeline_mode<synchronous>, transform_indices = @transform_6, window_bounds = array<i64: 32, 15>}, {pipeline_mode = #tpu.pipeline_mode<synchronous>, transform_indices = @transform_7, window_bounds = array<i64: 1, 15>}, {transform_indices = @transform_8, window_bounds = array<i64: 5, 8, 3>}]} {
    %c0 = arith.constant 0 : index
    %c0_0 = arith.constant 0 : index
    %0 = vector.load %arg1[%c0, %c0_0] : memref<8x196xf32, #tpu.memory_space<vmem>>, vector<8x196xf32>
    %c0_1 = arith.constant 0 : index
    %c0_2 = arith.constant 0 : index
    %1 = vector.load %arg3[%c0_1, %c0_2] : memref<196x32xf32, #tpu.memory_space<vmem>>, vector<196x32xf32>
    %cst = arith.constant dense<0.000000e+00> : vector<8x32xf32>
    %2 = tpu.matmul %0, %1, %cst {dimension_numbers = #tpu.dot_dimension_numbers<[1], [0], [0], [1], [0, 0, 1, 1], [], []>} : vector<8x196xf32>, vector<196x32xf32>, vector<8x32xf32> -> vector<8x32xf32>
    %c0_3 = arith.constant 0 : index
    %c0_4 = arith.constant 0 : index
    %3 = vector.load %arg4[%c0_3, %c0_4] : memref<1x32xf32, #tpu.memory_space<vmem>>, vector<1x32xf32>
    %4 = vector.broadcast %3 : vector<1x32xf32> to vector<8x32xf32>
    %5 = arith.addf %2, %4 : vector<8x32xf32>
    %cst_5 = arith.constant 0.000000e+00 : f32
    %6 = vector.broadcast %cst_5 : f32 to vector<8x32xf32>
    %7 = arith.maximumf %5, %6 : vector<8x32xf32>
    %c0_6 = arith.constant 0 : index
    %c0_7 = arith.constant 0 : index
    %8 = vector.load %arg5[%c0_6, %c0_7] : memref<32x32xf32, #tpu.memory_space<vmem>>, vector<32x32xf32>
    %cst_8 = arith.constant dense<0.000000e+00> : vector<8x32xf32>
    %9 = tpu.matmul %7, %8, %cst_8 {dimension_numbers = #tpu.dot_dimension_numbers<[1], [0], [0], [1], [0, 0, 1, 1], [], []>} : vector<8x32xf32>, vector<32x32xf32>, vector<8x32xf32> -> vector<8x32xf32>
    %c0_9 = arith.constant 0 : index
    %c0_10 = arith.constant 0 : index
    %10 = vector.load %arg6[%c0_9, %c0_10] : memref<1x32xf32, #tpu.memory_space<vmem>>, vector<1x32xf32>
    %11 = vector.broadcast %10 : vector<1x32xf32> to vector<8x32xf32>
    %12 = arith.addf %9, %11 : vector<8x32xf32>
    %cst_11 = arith.constant 0.000000e+00 : f32
    %13 = vector.broadcast %cst_11 : f32 to vector<8x32xf32>
    %14 = arith.maximumf %12, %13 : vector<8x32xf32>
    %c0_12 = arith.constant 0 : index
    %c0_13 = arith.constant 0 : index
    %15 = vector.load %arg7[%c0_12, %c0_13] : memref<32x15xf32, #tpu.memory_space<vmem>>, vector<32x15xf32>
    %cst_14 = arith.constant dense<0.000000e+00> : vector<8x15xf32>
    %16 = tpu.matmul %14, %15, %cst_14 {dimension_numbers = #tpu.dot_dimension_numbers<[1], [0], [0], [1], [0, 0, 1, 1], [], []>} : vector<8x32xf32>, vector<32x15xf32>, vector<8x15xf32> -> vector<8x15xf32>
    %c0_15 = arith.constant 0 : index
    %c0_16 = arith.constant 0 : index
    %17 = vector.load %arg8[%c0_15, %c0_16] : memref<1x15xf32, #tpu.memory_space<vmem>>, vector<1x15xf32>
    %18 = vector.broadcast %17 : vector<1x15xf32> to vector<8x15xf32>
    %19 = arith.addf %16, %18 : vector<8x15xf32>
    %20 = vector.extract_strided_slice %19 {offsets = [0, 0], sizes = [8, 3], strides = [1, 1]} : vector<8x15xf32> to vector<8x3xf32>
    %cst_17 = arith.constant dense<0xFF800000> : vector<8xf32>
    %21 = vector.multi_reduction <maximumf>, %20, %cst_17 [1] : vector<8x3xf32> to vector<8xf32>
    %22 = vector.shape_cast %21 : vector<8xf32> to vector<8x1xf32>
    %23 = vector.broadcast %22 : vector<8x1xf32> to vector<8x3xf32>
    %24 = arith.subf %20, %23 : vector<8x3xf32>
    %25 = math.exp %24 : vector<8x3xf32>
    %cst_18 = arith.constant dense<0.000000e+00> : vector<8xf32>
    %26 = vector.multi_reduction <add>, %25, %cst_18 [1] : vector<8x3xf32> to vector<8xf32>
    %27 = vector.shape_cast %26 : vector<8xf32> to vector<8x1xf32>
    %28 = vector.broadcast %27 : vector<8x1xf32> to vector<8x3xf32>
    %29 = arith.divf %25, %28 : vector<8x3xf32>
    %c0_19 = arith.constant 0 : index
    %c0_20 = arith.constant 0 : index
    %30 = vector.load %arg2[%c0_19, %c0_20] : memref<8x4xf32, #tpu.memory_space<vmem>>, vector<8x4xf32>
    %31 = vector.extract_strided_slice %30 {offsets = [0, 2], sizes = [8, 1], strides = [1, 1]} : vector<8x4xf32> to vector<8x1xf32>
    %32 = vector.extract_strided_slice %30 {offsets = [0, 0], sizes = [8, 1], strides = [1, 1]} : vector<8x4xf32> to vector<8x1xf32>
    %33 = arith.subf %31, %32 : vector<8x1xf32>
    %34 = vector.extract_strided_slice %30 {offsets = [0, 3], sizes = [8, 1], strides = [1, 1]} : vector<8x4xf32> to vector<8x1xf32>
    %35 = vector.extract_strided_slice %30 {offsets = [0, 1], sizes = [8, 1], strides = [1, 1]} : vector<8x4xf32> to vector<8x1xf32>
    %36 = arith.subf %34, %35 : vector<8x1xf32>
    %37 = vector.extract_strided_slice %30 {offsets = [0, 0], sizes = [8, 1], strides = [1, 1]} : vector<8x4xf32> to vector<8x1xf32>
    %cst_21 = arith.constant 5.000000e-01 : f32
    %38 = vector.broadcast %cst_21 : f32 to vector<8x1xf32>
    %39 = arith.mulf %38, %33 : vector<8x1xf32>
    %40 = arith.addf %37, %39 : vector<8x1xf32>
    %41 = vector.extract_strided_slice %30 {offsets = [0, 1], sizes = [8, 1], strides = [1, 1]} : vector<8x4xf32> to vector<8x1xf32>
    %cst_22 = arith.constant 5.000000e-01 : f32
    %42 = vector.broadcast %cst_22 : f32 to vector<8x1xf32>
    %43 = arith.mulf %42, %36 : vector<8x1xf32>
    %44 = arith.addf %41, %43 : vector<8x1xf32>
    %45 = vector.extract_strided_slice %19 {offsets = [0, 3], sizes = [8, 3], strides = [1, 1]} : vector<8x15xf32> to vector<8x3xf32>
    %cst_23 = arith.constant 1.000000e+01 : f32
    %46 = vector.broadcast %cst_23 : f32 to vector<8x3xf32>
    %47 = arith.divf %45, %46 : vector<8x3xf32>
    %48 = vector.extract_strided_slice %19 {offsets = [0, 6], sizes = [8, 3], strides = [1, 1]} : vector<8x15xf32> to vector<8x3xf32>
    %cst_24 = arith.constant 1.000000e+01 : f32
    %49 = vector.broadcast %cst_24 : f32 to vector<8x3xf32>
    %50 = arith.divf %48, %49 : vector<8x3xf32>
    %51 = vector.extract_strided_slice %19 {offsets = [0, 9], sizes = [8, 3], strides = [1, 1]} : vector<8x15xf32> to vector<8x3xf32>
    %cst_25 = arith.constant 5.000000e+00 : f32
    %52 = vector.broadcast %cst_25 : f32 to vector<8x3xf32>
    %53 = arith.divf %51, %52 : vector<8x3xf32>
    %cst_26 = arith.constant 4.13516665 : f32
    %54 = vector.broadcast %cst_26 : f32 to vector<8x3xf32>
    %55 = arith.minimumf %53, %54 : vector<8x3xf32>
    %56 = vector.extract_strided_slice %19 {offsets = [0, 12], sizes = [8, 3], strides = [1, 1]} : vector<8x15xf32> to vector<8x3xf32>
    %cst_27 = arith.constant 5.000000e+00 : f32
    %57 = vector.broadcast %cst_27 : f32 to vector<8x3xf32>
    %58 = arith.divf %56, %57 : vector<8x3xf32>
    %cst_28 = arith.constant 4.13516665 : f32
    %59 = vector.broadcast %cst_28 : f32 to vector<8x3xf32>
    %60 = arith.minimumf %58, %59 : vector<8x3xf32>
    %61 = vector.broadcast %33 : vector<8x1xf32> to vector<8x3xf32>
    %62 = arith.mulf %47, %61 : vector<8x3xf32>
    %63 = vector.broadcast %40 : vector<8x1xf32> to vector<8x3xf32>
    %64 = arith.addf %62, %63 : vector<8x3xf32>
    %65 = vector.broadcast %36 : vector<8x1xf32> to vector<8x3xf32>
    %66 = arith.mulf %50, %65 : vector<8x3xf32>
    %67 = vector.broadcast %44 : vector<8x1xf32> to vector<8x3xf32>
    %68 = arith.addf %66, %67 : vector<8x3xf32>
    %69 = math.exp %55 : vector<8x3xf32>
    %70 = vector.broadcast %33 : vector<8x1xf32> to vector<8x3xf32>
    %71 = arith.mulf %69, %70 : vector<8x3xf32>
    %72 = math.exp %60 : vector<8x3xf32>
    %73 = vector.broadcast %36 : vector<8x1xf32> to vector<8x3xf32>
    %74 = arith.mulf %72, %73 : vector<8x3xf32>
    %c0_29 = arith.constant 0 : index
    %c0_30 = arith.constant 0 : index
    %c0_31 = arith.constant 0 : index
    %75 = vector.load %arg9[%c0_29, %c0_30, %c0_31] : memref<5x8x3xf32, #tpu.memory_space<vmem>>, vector<1x8x3xf32>
    %76 = vector.shape_cast %75 : vector<1x8x3xf32> to vector<8x3xf32>
    %77 = vector.shape_cast %29 : vector<8x3xf32> to vector<1x8x3xf32>
    tpu.vector_store %arg9[%c0_29, %c0_30, %c0_31], %77 {strides = array<i32>} : memref<5x8x3xf32, #tpu.memory_space<vmem>>, vector<1x8x3xf32>,
    %cst_32 = arith.constant 5.000000e-01 : f32
    %78 = vector.broadcast %cst_32 : f32 to vector<8x3xf32>
    %79 = arith.mulf %78, %71 : vector<8x3xf32>
    %80 = arith.subf %64, %79 : vector<8x3xf32>
    %cst_33 = arith.constant 0.000000e+00 : f32
    %cst_34 = arith.constant 1.600000e+01 : f32
    %81 = vector.broadcast %cst_33 : f32 to vector<8x3xf32>
    %82 = arith.maximumf %81, %80 : vector<8x3xf32>
    %83 = vector.broadcast %cst_34 : f32 to vector<8x3xf32>
    %84 = arith.minimumf %83, %82 : vector<8x3xf32>
    %c1 = arith.constant 1 : index
    %c0_35 = arith.constant 0 : index
    %c0_36 = arith.constant 0 : index
    %85 = vector.load %arg9[%c1, %c0_35, %c0_36] : memref<5x8x3xf32, #tpu.memory_space<vmem>>, vector<1x8x3xf32>
    %86 = vector.shape_cast %85 : vector<1x8x3xf32> to vector<8x3xf32>
    %87 = vector.shape_cast %84 : vector<8x3xf32> to vector<1x8x3xf32>
    tpu.vector_store %arg9[%c1, %c0_35, %c0_36], %87 {strides = array<i32>} : memref<5x8x3xf32, #tpu.memory_space<vmem>>, vector<1x8x3xf32>,
    %cst_37 = arith.constant 5.000000e-01 : f32
    %88 = vector.broadcast %cst_37 : f32 to vector<8x3xf32>
    %89 = arith.mulf %88, %74 : vector<8x3xf32>
    %90 = arith.subf %68, %89 : vector<8x3xf32>
    %cst_38 = arith.constant 0.000000e+00 : f32
    %cst_39 = arith.constant 1.600000e+01 : f32
    %91 = vector.broadcast %cst_38 : f32 to vector<8x3xf32>
    %92 = arith.maximumf %91, %90 : vector<8x3xf32>
    %93 = vector.broadcast %cst_39 : f32 to vector<8x3xf32>
    %94 = arith.minimumf %93, %92 : vector<8x3xf32>
    %c2 = arith.constant 2 : index
    %c0_40 = arith.constant 0 : index
    %c0_41 = arith.constant 0 : index
    %95 = vector.load %arg9[%c2, %c0_40, %c0_41] : memref<5x8x3xf32, #tpu.memory_space<vmem>>, vector<1x8x3xf32>
    %96 = vector.shape_cast %95 : vector<1x8x3xf32> to vector<8x3xf32>
    %97 = vector.shape_cast %94 : vector<8x3xf32> to vector<1x8x3xf32>
    tpu.vector_store %arg9[%c2, %c0_40, %c0_41], %97 {strides = array<i32>} : memref<5x8x3xf32, #tpu.memory_space<vmem>>, vector<1x8x3xf32>,
    %cst_42 = arith.constant 5.000000e-01 : f32
    %98 = vector.broadcast %cst_42 : f32 to vector<8x3xf32>
    %99 = arith.mulf %98, %71 : vector<8x3xf32>
    %100 = arith.addf %64, %99 : vector<8x3xf32>
    %cst_43 = arith.constant 0.000000e+00 : f32
    %cst_44 = arith.constant 1.600000e+01 : f32
    %101 = vector.broadcast %cst_43 : f32 to vector<8x3xf32>
    %102 = arith.maximumf %101, %100 : vector<8x3xf32>
    %103 = vector.broadcast %cst_44 : f32 to vector<8x3xf32>
    %104 = arith.minimumf %103, %102 : vector<8x3xf32>
    %c3 = arith.constant 3 : index
    %c0_45 = arith.constant 0 : index
    %c0_46 = arith.constant 0 : index
    %105 = vector.load %arg9[%c3, %c0_45, %c0_46] : memref<5x8x3xf32, #tpu.memory_space<vmem>>, vector<1x8x3xf32>
    %106 = vector.shape_cast %105 : vector<1x8x3xf32> to vector<8x3xf32>
    %107 = vector.shape_cast %104 : vector<8x3xf32> to vector<1x8x3xf32>
    tpu.vector_store %arg9[%c3, %c0_45, %c0_46], %107 {strides = array<i32>} : memref<5x8x3xf32, #tpu.memory_space<vmem>>, vector<1x8x3xf32>,
    %cst_47 = arith.constant 5.000000e-01 : f32
    %108 = vector.broadcast %cst_47 : f32 to vector<8x3xf32>
    %109 = arith.mulf %108, %74 : vector<8x3xf32>
    %110 = arith.addf %68, %109 : vector<8x3xf32>
    %cst_48 = arith.constant 0.000000e+00 : f32
    %cst_49 = arith.constant 1.600000e+01 : f32
    %111 = vector.broadcast %cst_48 : f32 to vector<8x3xf32>
    %112 = arith.maximumf %111, %110 : vector<8x3xf32>
    %113 = vector.broadcast %cst_49 : f32 to vector<8x3xf32>
    %114 = arith.minimumf %113, %112 : vector<8x3xf32>
    %c4 = arith.constant 4 : index
    %c0_50 = arith.constant 0 : index
    %c0_51 = arith.constant 0 : index
    %115 = vector.load %arg9[%c4, %c0_50, %c0_51] : memref<5x8x3xf32, #tpu.memory_space<vmem>>, vector<1x8x3xf32>
    %116 = vector.shape_cast %115 : vector<1x8x3xf32> to vector<8x3xf32>
    %117 = vector.shape_cast %114 : vector<8x3xf32> to vector<1x8x3xf32>
    tpu.vector_store %arg9[%c4, %c0_50, %c0_51], %117 {strides = array<i32>} : memref<5x8x3xf32, #tpu.memory_space<vmem>>, vector<1x8x3xf32>,
    return
  }
  func.func @transform_0(%arg0: i32) -> (i32, i32) {
    %c0_i32 = arith.constant 0 : i32
    %c0_i32_0 = arith.constant 0 : i32
    return %arg0, %c0_i32 : i32, i32
  }
  func.func @transform_1(%arg0: i32) -> (i32, i32) {
    %c0_i32 = arith.constant 0 : i32
    %c0_i32_0 = arith.constant 0 : i32
    return %arg0, %c0_i32 : i32, i32
  }
  func.func @transform_2(%arg0: i32) -> (i32, i32) {
    %c0_i32 = arith.constant 0 : i32
    %c0_i32_0 = arith.constant 0 : i32
    %c0_i32_1 = arith.constant 0 : i32
    return %c0_i32, %c0_i32_0 : i32, i32
  }
  func.func @transform_3(%arg0: i32) -> (i32, i32) {
    %c0_i32 = arith.constant 0 : i32
    %c0_i32_0 = arith.constant 0 : i32
    %c0_i32_1 = arith.constant 0 : i32
    return %c0_i32, %c0_i32_0 : i32, i32
  }
  func.func @transform_4(%arg0: i32) -> (i32, i32) {
    %c0_i32 = arith.constant 0 : i32
    %c0_i32_0 = arith.constant 0 : i32
    %c0_i32_1 = arith.constant 0 : i32
    return %c0_i32, %c0_i32_0 : i32, i32
  }
  func.func @transform_5(%arg0: i32) -> (i32, i32) {
    %c0_i32 = arith.constant 0 : i32
    %c0_i32_0 = arith.constant 0 : i32
    %c0_i32_1 = arith.constant 0 : i32
    return %c0_i32, %c0_i32_0 : i32, i32
  }
  func.func @transform_6(%arg0: i32) -> (i32, i32) {
    %c0_i32 = arith.constant 0 : i32
    %c0_i32_0 = arith.constant 0 : i32
    %c0_i32_1 = arith.constant 0 : i32
    return %c0_i32, %c0_i32_0 : i32, i32
  }
  func.func @transform_7(%arg0: i32) -> (i32, i32) {
    %c0_i32 = arith.constant 0 : i32
    %c0_i32_0 = arith.constant 0 : i32
    %c0_i32_1 = arith.constant 0 : i32
    return %c0_i32, %c0_i32_0 : i32, i32
  }
  func.func @transform_8(%arg0: i32) -> (i32, i32, i32) {
    %c0_i32 = arith.constant 0 : i32
    %c0_i32_0 = arith.constant 0 : i32
    %c0_i32_1 = arith.constant 0 : i32
    return %c0_i32, %arg0, %c0_i32_0 : i32, i32, i32
  }
}

</mosaic_0001>

<llo_original>
// kernel: roi_heads_forward.2
$region0: #{roi_heads_forward.2}
  #allocation0 [shape = 'u32[]', space=smem, size = 0x4, offset = 0x4, fixed_abs, tag = 'smem constant byte address 0x4 - core index']
  #allocation1 [shape = 'u32[144,128]{1,0:T(1,128)}', space=vmem, size = 0x12000, scoped, tag = 'internal scratch']
  %s0 = inlined_call_operand.vmem [shape: f32[16,49,256], index: 0, kind: input, shape index: {}]
  %s1 = inlined_call_operand.vmem [shape: f32[256,4], index: 1, kind: input, shape index: {}]
  %s2 = inlined_call_operand.vmem [shape: f32[16,49,4], index: 2, kind: output, shape index: {}]
  %s3 = sld [smem:[#allocation0]]
  $region41: #{roi_heads_forward.2} parent=0
    _
  %s5 = ssub.s32 1, %s3
  %s6 = scalar_select 0, %s5, %s3
  loop: start=0, step=1, limit=4
  $region2: #{roi_heads_forward.2} parent=0 // loop_pre_header
    _
  $region3: #{roi_heads_forward.2} parent=0 // loop_header
    %s8 = sphi 0, %s12
    %p9 = scmp.ge.s32.totalorder %s8, 4
    %s18 = sphi 0, %s20
    %s21 = sphi 0, %s18
    %s22 = sphi 0, %s21
    %s38 = sphi 0, %s22
    %s42 = sphi 0, %s42
    %s44 = sphi 0, %s42
    %s45 = sphi 0, %s44
    %s59 = sphi 0, %s45
    %s65 = sphi 0, %s67
    %s68 = sphi 0, %s65
    %s69 = sphi 0, %s68
    %s85 = sphi 0, %s69
  $region4: #{roi_heads_forward.2} parent=0 // loop_header_branch
    %11 = sbr.rel (%p9) target = $region8
  $region5: #{roi_heads_forward.2} parent=0 // loop_body
    %s13 = ssub.s32 %s8, 1
    %s14 = ssub.s32 %s8, 2
    %s15 = sadd.s32 %s8, 1
    %s16 = ssub.s32 %s8, %s15
    %p17 = scmp.eq.s32.totalorder %s16, 0
    %s19 = sadd.s32 %s18, 1
    %s20 = scalar_select %p17, %s18, %s19
    %p23 = pneg %p17
    %p24 = scmp.eq.s32.totalorder %s8, 1
    %p25 = por %p23, %p24
    %p26 = scmp.ne.s32.totalorder %s18, %s21
    %p27 = scmp.eq.s32.totalorder %s8, 0
    %p28 = por %p26, %p27
    %p29 = scmp.ne.s32.totalorder %s18, %s21
    %p30 = scmp.eq.s32.totalorder %s13, 1
    %p31 = por %p29, %p30
    %p32 = scmp.ne.s32.totalorder %s21, %s22
    %p33 = scmp.eq.s32.totalorder %s13, 0
    %p34 = por %p32, %p33
    %p35 = scmp.ne.s32.totalorder %s21, %s22
    %p36 = scmp.eq.s32.totalorder %s14, 1
    %p37 = por %p35, %p36
    %p39 = scmp.ne.s32.totalorder %s22, %s38
    %p40 = scmp.eq.s32.totalorder %s14, 0
    %p41 = por %p39, %p40
    %s43 = sadd.s32 %s42, 1
    %p46 = scmp.eq.s32.totalorder %s8, 1
    %p47 = scmp.ne.s32.totalorder %s42, %s44
    %p48 = scmp.eq.s32.totalorder %s8, 0
    %p49 = por %p47, %p48
    %p50 = scmp.ne.s32.totalorder %s42, %s44
    %p51 = scmp.eq.s32.totalorder %s13, 1
    %p52 = por %p50, %p51
    %p53 = scmp.ne.s32.totalorder %s44, %s45
    %p54 = scmp.eq.s32.totalorder %s13, 0
    %p55 = por %p53, %p54
    %p56 = scmp.ne.s32.totalorder %s44, %s45
    %p57 = scmp.eq.s32.totalorder %s14, 1
    %p58 = por %p56, %p57
    %p60 = scmp.ne.s32.totalorder %s45, %s59
    %p61 = scmp.eq.s32.totalorder %s14, 0
    %p62 = por %p60, %p61
    %s63 = ssub.s32 %s8, %s15
    %p64 = scmp.eq.s32.totalorder %s63, 0
    %s66 = sadd.s32 %s65, 1
    %s67 = scalar_select %p64, %s65, %s66
    %p70 = pneg %p64
    %p71 = scmp.eq.s32.totalorder %s8, 1
    %p72 = por %p70, %p71
    %p73 = scmp.ne.s32.totalorder %s65, %s68
    %p74 = scmp.eq.s32.totalorder %s8, 0
    %p75 = por %p73, %p74
    %p76 = scmp.ne.s32.totalorder %s65, %s68
    %p77 = scmp.eq.s32.totalorder %s13, 1
    %p78 = por %p76, %p77
    %p79 = scmp.ne.s32.totalorder %s68, %s69
    %p80 = scmp.eq.s32.totalorder %s13, 0
    %p81 = por %p79, %p80
    %p82 = scmp.ne.s32.totalorder %s68, %s69
    %p83 = scmp.eq.s32.totalorder %s14, 1
    %p84 = por %p82, %p83
    %p86 = scmp.ne.s32.totalorder %s69, %s85
    %p87 = scmp.eq.s32.totalorder %s14, 0
    %p88 = por %p86, %p87
    %p89 = scmp.le.s32.totalorder 1, %s8
    %p90 = scmp.lt.s32.totalorder %s8, 3
    %p91 = pnand %p89, %p90
    %p92 = pneg %p91
    // Predicated region
    $region9: #{roi_heads_forward.2} parent=5 // pred_check
      _
    $region10: #{roi_heads_forward.2} parent=5 // pred_check_branch
      %94 = sbr.rel (%p91) target = $region12
    $region11: #{roi_heads_forward.2} parent=5 // pred_region
      %s95 = ssub.s32 %s8, 1
      // Predicated region
      $region13: #{roi_heads_forward.2} parent=11 // pred_check
        %p96 = pneg %p55
      $region14: #{roi_heads_forward.2} parent=11 // pred_check_branch
        %98 = sbr.rel (%p96) target = $region16
      $region15: #{roi_heads_forward.2} parent=11 // pred_region
        _
      $region16: #{roi_heads_forward.2} parent=11 // pred_fallthru
        _
    $region12: #{roi_heads_forward.2} parent=5 // pred_fallthru
      _
    %p99 = scmp.lt.s32.totalorder %s8, 2
    // Predicated region
    $region17: #{roi_heads_forward.2} parent=5 // pred_check
      %p100 = pneg %p99
    $region18: #{roi_heads_forward.2} parent=5 // pred_check_branch
      %102 = sbr.rel (%p100) target = $region20
    $region19: #{roi_heads_forward.2} parent=5 // pred_region
      // Predicated region
      $region21: #{roi_heads_forward.2} parent=19 // pred_check
        %p103 = pneg %p28
      $region22: #{roi_heads_forward.2} parent=19 // pred_check_branch
        %105 = sbr.rel (%p103) target = $region24
      $region23: #{roi_heads_forward.2} parent=19 // pred_region
        %s106 = smul.u32 8, %s8
        %p107 = scmp.lt.s32.totalorder %s106, 15
        %s108 = scalar_select %p107, %s106, 15
        %s109 = smul.addr %s108, 14
        %s110 = smul.addr %s109, 8
        %s111 = scalar_lea.vmem %s0, %s110
        %s112 = smul.u32 8, %s8
      $region24: #{roi_heads_forward.2} parent=19 // pred_fallthru
        _
    $region20: #{roi_heads_forward.2} parent=5 // pred_fallthru
      _
    %p113 = scmp.le.s32.totalorder 1, %s8
    %p114 = scmp.lt.s32.totalorder %s8, 3
    %p115 = pnand %p113, %p114
    %p116 = pneg %p115
    // Predicated region
    $region25: #{roi_heads_forward.2} parent=5 // pred_check
      _
    $region26: #{roi_heads_forward.2} parent=5 // pred_check_branch
      %118 = sbr.rel (%p115) target = $region28
    $region27: #{roi_heads_forward.2} parent=5 // pred_region
      %s119 = ssub.s32 %s8, 1
      %s120 = smul.u32 8, %s13
      %p121 = scmp.lt.s32.totalorder %s120, 15
      %s122 = scalar_select %p121, %s120, 15
      %s123 = smul.addr %s122, 14
      %s124 = smul.addr %s123, 8
      %s125 = scalar_lea.vmem %s0, %s124
      %p126 = pneg %p34
      %p127 = pneg %p31
      %p128 = pneg %p55
      %p129 = pneg %p52
      %p130 = pneg %p81
      %p131 = pneg %p78
      %s132 = smul.u32 8, %s13
      %p133 = scmp.lt.s32.totalorder %s132, 15
      %s134 = scalar_select %p133, %s132, 15
      %s135 = smul.addr %s134, 7
      %s136 = smul.addr %s135, 8
      %s137 = scalar_lea.vmem %s2, %s136
      %s138 = smul.u32 8, %s13
      %p139 = scmp.lt.s32.totalorder %s138, 15
      %s140 = scalar_select %p139, %s138, 15
      %s141 = smul.addr %s140, 14
      %s142 = smul.addr %s141, 8
      %s143 = scalar_lea.vmem %s0, %s142
      %s144 = smul.u32 8, %s13
      %s145 = smul.u32 8, %s13
      %p146 = scmp.lt.s32.totalorder %s145, 15
      %s147 = scalar_select %p146, %s145, 15
      %s148 = smul.addr %s147, 7
      %s149 = smul.addr %s148, 8
      %s150 = scalar_lea.vmem %s2, %s149
      %s151 = smul.u32 8, %s13
      %v152 = vld [vmem:[%s1] sm:$0xff]
      %v153 = vld [vmem:[%s1 + $0x8] sm:$0xff]
      %v154 = vld [vmem:[%s1 + $0x10] sm:$0xff]
      %v155 = vld [vmem:[%s1 + $0x18] sm:$0xff]
      %v156 = vld [vmem:[%s1 + $0x20] sm:$0xff]
      %v157 = vld [vmem:[%s1 + $0x28] sm:$0xff]
      %v158 = vld [vmem:[%s1 + $0x30] sm:$0xff]
      %v159 = vld [vmem:[%s1 + $0x38] sm:$0xff]
      %v160 = vld [vmem:[%s1 + $0x40] sm:$0xff]
      %v161 = vld [vmem:[%s1 + $0x48] sm:$0xff]
      %v162 = vld [vmem:[%s1 + $0x50] sm:$0xff]
      %v163 = vld [vmem:[%s1 + $0x58] sm:$0xff]
      %v164 = vld [vmem:[%s1 + $0x60] sm:$0xff]
      %v165 = vld [vmem:[%s1 + $0x68] sm:$0xff]
      %v166 = vld [vmem:[%s1 + $0x70] sm:$0xff]
      %v167 = vld [vmem:[%s1 + $0x78] sm:$0xff]
      %v168 = vld [vmem:[%s1 + $0x80] sm:$0xff]
      %v169 = vld [vmem:[%s1 + $0x88] sm:$0xff]
      %v170 = vld [vmem:[%s1 + $0x90] sm:$0xff]
      %v171 = vld [vmem:[%s1 + $0x98] sm:$0xff]
      %v172 = vld [vmem:[%s1 + $0xa0] sm:$0xff]
      %v173 = vld [vmem:[%s1 + $0xa8] sm:$0xff]
      %v174 = vld [vmem:[%s1 + $0xb0] sm:$0xff]
      %v175 = vld [vmem:[%s1 + $0xb8] sm:$0xff]
      %v176 = vld [vmem:[%s1 + $0xc0] sm:$0xff]
      %v177 = vld [vmem:[%s1 + $0xc8] sm:$0xff]
      %v178 = vld [vmem:[%s1 + $0xd0] sm:$0xff]
      %v179 = vld [vmem:[%s1 + $0xd8] sm:$0xff]
      %v180 = vld [vmem:[%s1 + $0xe0] sm:$0xff]
      %v181 = vld [vmem:[%s1 + $0xe8] sm:$0xff]
      %v182 = vld [vmem:[%s1 + $0xf0] sm:$0xff]
      %v183 = vld [vmem:[%s1 + $0xf8] sm:$0xff]
      %v184 = vld [vmem:[%s143] sm:$0xff]
      %v185 = vld [vmem:[%s143 + $0x8] sm:$0xff]
      %v186 = vld [vmem:[%s143 + $0x10] sm:$0xff]
      %v187 = vld [vmem:[%s143 + $0x18] sm:$0xff]
      %v188 = vld [vmem:[%s143 + $0x20] sm:$0xff]
      %v189 = vld [vmem:[%s143 + $0x28] sm:$0xff]
      %v190 = vld [vmem:[%s143 + $0x30] sm:$0xff]
      %v191 = vld [vmem:[%s143 + $0x38] sm:$0xff]
      %v192 = vld [vmem:[%s143 + $0x40] sm:$0xff]
      %v193 = vld [vmem:[%s143 + $0x48] sm:$0xff]
      %v194 = vld [vmem:[%s143 + $0x50] sm:$0xff]
      %v195 = vld [vmem:[%s143 + $0x58] sm:$0xff]
      %v196 = vld [vmem:[%s143 + $0x60] sm:$0x1]
      %v197 = vld [vmem:[%s143 + $0x68] sm:$0x1]
      %198 = vmatprep.subr.mxu0 0.0
      %199 = vmatpush1.msra.mxu0 %v152
      %200 = vmatprep.subr.mxu0 0.0
      %201 = vmatpush1.msra.mxu0 %v153
      %202 = vmatprep.subr.mxu0 0.0
      %203 = vmatpush1.msra.mxu0 %v154
      %204 = vmatprep.subr.mxu0 0.0
      %205 = vmatpush1.msra.mxu0 %v155
      %206 = vmatprep.subr.mxu0 0.0
      %207 = vmatpush1.msra.mxu0 %v156
      %208 = vmatprep.subr.mxu0 0.0
      %209 = vmatpush1.msra.mxu0 %v157
      %210 = vmatprep.subr.mxu0 0.0
      %211 = vmatpush1.msra.mxu0 %v158
      %212 = vmatprep.subr.mxu0 0.0
      %213 = vmatpush1.msra.mxu0 %v159
      %214 = vmatprep.subr.mxu0 0.0
      %215 = vmatpush1.msra.mxu0 %v160
      %216 = vmatprep.subr.mxu0 0.0
      %217 = vmatpush1.msra.mxu0 %v161
      %218 = vmatprep.subr.mxu0 0.0
      %219 = vmatpush1.msra.mxu0 %v162
      %220 = vmatprep.subr.mxu0 0.0
      %221 = vmatpush1.msra.mxu0 %v163
      %222 = vmatprep.subr.mxu0 0.0
      %223 = vmatpush1.msra.mxu0 %v164
      %224 = vmatprep.subr.mxu0 0.0
      %225 = vmatpush1.msra.mxu0 %v165
      %226 = vmatprep.subr.mxu0 0.0
      %227 = vmatpush1.msra.mxu0 %v166
      %228 = vmatprep.subr.mxu0 0.0
      %229 = vmatpush1.msra.mxu0 %v167
      %230 = vmatprep.subr.mxu0 0.0
      %231 = vmatpush1.msra.mxu0 %v168
      %232 = vmatprep.subr.mxu0 0.0
      %233 = vmatpush1.msra.mxu0 %v169
      %234 = vmatprep.subr.mxu0 0.0
      %235 = vmatpush1.msra.mxu0 %v170
      %236 = vmatprep.subr.mxu0 0.0
      %237 = vmatpush1.msra.mxu0 %v171
      %238 = vmatprep.subr.mxu0 0.0
      %239 = vmatpush1.msra.mxu0 %v172
      %240 = vmatprep.subr.mxu0 0.0
      %241 = vmatpush1.msra.mxu0 %v173
      %242 = vmatprep.subr.mxu0 0.0
      %243 = vmatpush1.msra.mxu0 %v174
      %244 = vmatprep.subr.mxu0 0.0
      %245 = vmatpush1.msra.mxu0 %v175
      %246 = vmatprep.subr.mxu0 0.0
      %247 = vmatpush1.msra.mxu0 %v176
      %248 = vmatprep.subr.mxu0 0.0
      %249 = vmatpush1.msra.mxu0 %v177
      %250 = vmatprep.subr.mxu0 0.0
      %251 = vmatpush1.msra.mxu0 %v178
      %252 = vmatprep.subr.mxu0 0.0
      %253 = vmatpush1.msra.mxu0 %v179
      %254 = vmatprep.subr.mxu0 0.0
      %255 = vmatpush1.msra.mxu0 %v180
      %256 = vmatprep.subr.mxu0 0.0
      %257 = vmatpush1.msra.mxu0 %v181
      %258 = vmatprep.subr.mxu0 0.0
      %259 = vmatpush1.msra.mxu0 %v182
      %260 = vmatprep.subr.mxu0 0.0
      %261 = vmatpush1.msra.mxu0 %v183
      %262 = vmatprep.mubr.f32.mxu0 %v185
      %263 = vmatmul.mubr.f32.gmra.mrb[0].mxu0 %v184
      %v264 = vpop.f32.mrb[0].mxu0
      %v265 = vadd.f32 0.0, %v264
      %v266 = vpop.f32.mrb[0].mxu0
      %267 = vmatprep.mubr.f32.mxu0 %v187
      %268 = vmatmul.mubr.f32.gmra.mrb[0].mxu0 %v186
      %v269 = vpop.f32.mrb[0].mxu0
      %v270 = vadd.f32 0.0, %v269
      %v271 = vpop.f32.mrb[0].mxu0
      %272 = vmatprep.mubr.f32.mxu0 %v189
      %273 = vmatmul.mubr.f32.gmra.mrb[0].mxu0 %v188
      %v274 = vpop.f32.mrb[0].mxu0
      %v275 = vadd.f32 0.0, %v274
      %v276 = vpop.f32.mrb[0].mxu0
      %277 = vmatprep.mubr.f32.mxu0 %v191
      %278 = vmatmul.mubr.f32.gmra.mrb[0].mxu0 %v190
      %v279 = vpop.f32.mrb[0].mxu0
      %v280 = vadd.f32 0.0, %v279
      %v281 = vpop.f32.mrb[0].mxu0
      %282 = vmatprep.mubr.f32.mxu0 %v193
      %283 = vmatmul.mubr.f32.gmra.mrb[0].mxu0 %v192
      %v284 = vpop.f32.mrb[0].mxu0
      %v285 = vadd.f32 0.0, %v284
      %v286 = vpop.f32.mrb[0].mxu0
      %287 = vmatprep.mubr.f32.mxu0 %v195
      %288 = vmatmul.mubr.f32.gmra.mrb[0].mxu0 %v194
      %v289 = vpop.f32.mrb[0].mxu0
      %v290 = vadd.f32 0.0, %v289
      %v291 = vpop.f32.mrb[0].mxu0
      %292 = vmatprep.mubr.f32.mxu0 %v197
      %293 = vmatmul.mubr.f32.gmra.mrb[0].mxu0 %v196
      %v294 = vpop.f32.mrb[0].mxu0
      %v295 = vadd.f32 0.0, %v294
      %v296 = vpop.f32.mrb[0].mxu0
      %297 = vdwg.mxu0
      %vm298 = vcmask 31744
      %299 = vst.msk [vmem:[%s150] sm:$0xff] %vm298, %v265
      %300 = vst.msk [vmem:[%s150 + $0x8] sm:$0xff] %vm298, %v270
      %301 = vst.msk [vmem:[%s150 + $0x10] sm:$0xff] %vm298, %v275
      %302 = vst.msk [vmem:[%s150 + $0x18] sm:$0xff] %vm298, %v280
      %303 = vst.msk [vmem:[%s150 + $0x20] sm:$0xff] %vm298, %v285
      %304 = vst.msk [vmem:[%s150 + $0x28] sm:$0xff] %vm298, %v290
      %vm305 = vcmask 24576
      %306 = vst.msk [vmem:[%s150 + $0x30] sm:$0x1] %vm305, %v295
      %s307 = scalar_lea.vmem %s143, 112
      %v308 = vld [vmem:[%s307] sm:$0xff]
      %v309 = vld [vmem:[%s307 + $0x8] sm:$0xff]
      %v310 = vld [vmem:[%s307 + $0x10] sm:$0xff]
      %v311 = vld [vmem:[%s307 + $0x18] sm:$0xff]
      %v312 = vld [vmem:[%s307 + $0x20] sm:$0xff]
      %v313 = vld [vmem:[%s307 + $0x28] sm:$0xff]
      %v314 = vld [vmem:[%s307 + $0x30] sm:$0xff]
      %v315 = vld [vmem:[%s307 + $0x38] sm:$0xff]
      %v316 = vld [vmem:[%s307 + $0x40] sm:$0xff]
      %v317 = vld [vmem:[%s307 + $0x48] sm:$0xff]
      %v318 = vld [vmem:[%s307 + $0x50] sm:$0xff]
      %v319 = vld [vmem:[%s307 + $0x58] sm:$0xff]
      %v320 = vld [vmem:[%s307 + $0x60] sm:$0x1]
      %v321 = vld [vmem:[%s307 + $0x68] sm:$0x1]
      %322 = vmatprep.subr.mxu0 0.0
      %323 = vmatpush1.msra.mxu0 %v152
      %324 = vmatprep.subr.mxu0 0.0
      %325 = vmatpush1.msra.mxu0 %v153
      %326 = vmatprep.subr.mxu0 0.0
      %327 = vmatpush1.msra.mxu0 %v154
      %328 = vmatprep.subr.mxu0 0.0
      %329 = vmatpush1.msra.mxu0 %v155
      %330 = vmatprep.subr.mxu0 0.0
      %331 = vmatpush1.msra.mxu0 %v156
      %332 = vmatprep.subr.mxu0 0.0
      %333 = vmatpush1.msra.mxu0 %v157
      %334 = vmatprep.subr.mxu0 0.0
      %335 = vmatpush1.msra.mxu0 %v158
      %336 = vmatprep.subr.mxu0 0.0
      %337 = vmatpush1.msra.mxu0 %v159
      %338 = vmatprep.subr.mxu0 0.0
      %339 = vmatpush1.msra.mxu0 %v160
      %340 = vmatprep.subr.mxu0 0.0
      %341 = vmatpush1.msra.mxu0 %v161
      %342 = vmatprep.subr.mxu0 0.0
      %343 = vmatpush1.msra.mxu0 %v162
      %344 = vmatprep.subr.mxu0 0.0
      %345 = vmatpush1.msra.mxu0 %v163
      %346 = vmatprep.subr.mxu0 0.0
      %347 = vmatpush1.msra.mxu0 %v164
      %348 = vmatprep.subr.mxu0 0.0
      %349 = vmatpush1.msra.mxu0 %v165
      %350 = vmatprep.subr.mxu0 0.0
      %351 = vmatpush1.msra.mxu0 %v166
      %352 = vmatprep.subr.mxu0 0.0
      %353 = vmatpush1.msra.mxu0 %v167
      %354 = vmatprep.subr.mxu0 0.0
      %355 = vmatpush1.msra.mxu0 %v168
      %356 = vmatprep.subr.mxu0 0.0
      %357 = vmatpush1.msra.mxu0 %v169
      %358 = vmatprep.subr.mxu0 0.0
      %359 = vmatpush1.msra.mxu0 %v170
      %360 = vmatprep.subr.mxu0 0.0
      %361 = vmatpush1.msra.mxu0 %v171
      %362 = vmatprep.subr.mxu0 0.0
      %363 = vmatpush1.msra.mxu0 %v172
      %364 = vmatprep.subr.mxu0 0.0
      %365 = vmatpush1.msra.mxu0 %v173
      %366 = vmatprep.subr.mxu0 0.0
      %367 = vmatpush1.msra.mxu0 %v174
      %368 = vmatprep.subr.mxu0 0.0
      %369 = vmatpush1.msra.mxu0 %v175
      %370 = vmatprep.subr.mxu0 0.0
      %371 = vmatpush1.msra.mxu0 %v176
      %372 = vmatprep.subr.mxu0 0.0
      %373 = vmatpush1.msra.mxu0 %v177
      %374 = vmatprep.subr.mxu0 0.0
      %375 = vmatpush1.msra.mxu0 %v178
      %376 = vmatprep.subr.mxu0 0.0
      %377 = vmatpush1.msra.mxu0 %v179
      %378 = vmatprep.subr.mxu0 0.0
      %379 = vmatpush1.msra.mxu0 %v180
      %380 = vmatprep.subr.mxu0 0.0
      %381 = vmatpush1.msra.mxu0 %v181
      %382 = vmatprep.subr.mxu0 0.0
      %383 = vmatpush1.msra.mxu0 %v182
      %384 = vmatprep.subr.mxu0 0.0
      %385 = vmatpush1.msra.mxu0 %v183
      %386 = vmatprep.mubr.f32.mxu0 %v309
      %387 = vmatmul.mubr.f32.gmra.mrb[0].mxu0 %v308
      %v388 = vpop.f32.mrb[0].mxu0
      %v389 = vadd.f32 0.0, %v388
      %v390 = vpop.f32.mrb[0].mxu0
      %391 = vmatprep.mubr.f32.mxu0 %v311
      %392 = vmatmul.mubr.f32.gmra.mrb[0].mxu0 %v310
      %v393 = vpop.f32.mrb[0].mxu0
      %v394 = vadd.f32 0.0, %v393
      %v395 = vpop.f32.mrb[0].mxu0
      %396 = vmatprep.mubr.f32.mxu0 %v313
      %397 = vmatmul.mubr.f32.gmra.mrb[0].mxu0 %v312
      %v398 = vpop.f32.mrb[0].mxu0
      %v399 = vadd.f32 0.0, %v398
      %v400 = vpop.f32.mrb[0].mxu0
      %401 = vmatprep.mubr.f32.mxu0 %v315
      %402 = vmatmul.mubr.f32.gmra.mrb[0].mxu0 %v314
      %v403 = vpop.f32.mrb[0].mxu0
      %v404 = vadd.f32 0.0, %v403
      %v405 = vpop.f32.mrb[0].mxu0
      %406 = vmatprep.mubr.f32.mxu0 %v317
      %407 = vmatmul.mubr.f32.gmra.mrb[0].mxu0 %v316
      %v408 = vpop.f32.mrb[0].mxu0
      %v409 = vadd.f32 0.0, %v408
      %v410 = vpop.f32.mrb[0].mxu0
      %411 = vmatprep.mubr.f32.mxu0 %v319
      %412 = vmatmul.mubr.f32.gmra.mrb[0].mxu0 %v318
      %v413 = vpop.f32.mrb[0].mxu0
      %v414 = vadd.f32 0.0, %v413
      %v415 = vpop.f32.mrb[0].mxu0
      %416 = vmatprep.mubr.f32.mxu0 %v321
      %417 = vmatmul.mubr.f32.gmra.mrb[0].mxu0 %v320
      %v418 = vpop.f32.mrb[0].mxu0
      %v419 = vadd.f32 0.0, %v418
      %v420 = vpop.f32.mrb[0].mxu0
      %421 = vdwg.mxu0
      %s422 = scalar_lea.vmem %s150, 56
      %423 = vst.msk [vmem:[%s422] sm:$0xff] %vm298, %v389
      %424 = vst.msk [vmem:[%s422 + $0x8] sm:$0xff] %vm298, %v394
      %425 = vst.msk [vmem:[%s422 + $0x10] sm:$0xff] %vm298, %v399
      %426 = vst.msk [vmem:[%s422 + $0x18] sm:$0xff] %vm298, %v404
      %427 = vst.msk [vmem:[%s422 + $0x20] sm:$0xff] %vm298, %v409
      %428 = vst.msk [vmem:[%s422 + $0x28] sm:$0xff] %vm298, %v414
      %429 = vst.msk [vmem:[%s422 + $0x30] sm:$0x1] %vm305, %v419
      %s430 = scalar_lea.vmem %s143, 224
      %v431 = vld [vmem:[%s430] sm:$0xff]
      %v432 = vld [vmem:[%s430 + $0x8] sm:$0xff]
      %v433 = vld [vmem:[%s430 + $0x10] sm:$0xff]
      %v434 = vld [vmem:[%s430 + $0x18] sm:$0xff]
      %v435 = vld [vmem:[%s430 + $0x20] sm:$0xff]
      %v436 = vld [vmem:[%s430 + $0x28] sm:$0xff]
      %v437 = vld [vmem:[%s430 + $0x30] sm:$0xff]
      %v438 = vld [vmem:[%s430 + $0x38] sm:$0xff]
      %v439 = vld [vmem:[%s430 + $0x40] sm:$0xff]
      %v440 = vld [vmem:[%s430 + $0x48] sm:$0xff]
      %v441 = vld [vmem:[%s430 + $0x50] sm:$0xff]
      %v442 = vld [vmem:[%s430 + $0x58] sm:$0xff]
      %v443 = vld [vmem:[%s430 + $0x60] sm:$0x1]
      %v444 = vld [vmem:[%s430 + $0x68] sm:$0x1]
      %445 = vmatprep.subr.mxu0 0.0
      %446 = vmatpush1.msra.mxu0 %v152
      %447 = vmatprep.subr.mxu0 0.0
      %448 = vmatpush1.msra.mxu0 %v153
      %449 = vmatprep.subr.mxu0 0.0
      %450 = vmatpush1.msra.mxu0 %v154
      %451 = vmatprep.subr.mxu0 0.0
      %452 = vmatpush1.msra.mxu0 %v155
      %453 = vmatprep.subr.mxu0 0.0
      %454 = vmatpush1.msra.mxu0 %v156
      %455 = vmatprep.subr.mxu0 0.0
      %456 = vmatpush1.msra.mxu0 %v157
      %457 = vmatprep.subr.mxu0 0.0
      %458 = vmatpush1.msra.mxu0 %v158
      %459 = vmatprep.subr.mxu0 0.0
      %460 = vmatpush1.msra.mxu0 %v159
      %461 = vmatprep.subr.mxu0 0.0
      %462 = vmatpush1.msra.mxu0 %v160
      %463 = vmatprep.subr.mxu0 0.0
      %464 = vmatpush1.msra.mxu0 %v161
      %465 = vmatprep.subr.mxu0 0.0
      %466 = vmatpush1.msra.mxu0 %v162
      %467 = vmatprep.subr.mxu0 0.0
      %468 = vmatpush1.msra.mxu0 %v163
      %469 = vmatprep.subr.mxu0 0.0
      %470 = vmatpush1.msra.mxu0 %v164
      %471 = vmatprep.subr.mxu0 0.0
      %472 = vmatpush1.msra.mxu0 %v165
      %473 = vmatprep.subr.mxu0 0.0
      %474 = vmatpush1.msra.mxu0 %v166
      %475 = vmatprep.subr.mxu0 0.0
      %476 = vmatpush1.msra.mxu0 %v167
      %477 = vmatprep.subr.mxu0 0.0
      %478 = vmatpush1.msra.mxu0 %v168
      %479 = vmatprep.subr.mxu0 0.0
      %480 = vmatpush1.msra.mxu0 %v169
      %481 = vmatprep.subr.mxu0 0.0
      %482 = vmatpush1.msra.mxu0 %v170
      %483 = vmatprep.subr.mxu0 0.0
      %484 = vmatpush1.msra.mxu0 %v171
      %485 = vmatprep.subr.mxu0 0.0
      %486 = vmatpush1.msra.mxu0 %v172
      %487 = vmatprep.subr.mxu0 0.0
      %488 = vmatpush1.msra.mxu0 %v173
      %489 = vmatprep.subr.mxu0 0.0
      %490 = vmatpush1.msra.mxu0 %v174
      %491 = vmatprep.subr.mxu0 0.0
      %492 = vmatpush1.msra.mxu0 %v175
      %493 = vmatprep.subr.mxu0 0.0
      %494 = vmatpush1.msra.mxu0 %v176
      %495 = vmatprep.subr.mxu0 0.0
      %496 = vmatpush1.msra.mxu0 %v177
      %497 = vmatprep.subr.mxu0 0.0
      %498 = vmatpush1.msra.mxu0 %v178
      %499 = vmatprep.subr.mxu0 0.0
      %500 = vmatpush1.msra.mxu0 %v179
      %501 = vmatprep.subr.mxu0 0.0
      %502 = vmatpush1.msra.mxu0 %v180
      %503 = vmatprep.subr.mxu0 0.0
      %504 = vmatpush1.msra.mxu0 %v181
      %505 = vmatprep.subr.mxu0 0.0
      %506 = vmatpush1.msra.mxu0 %v182
      %507 = vmatprep.subr.mxu0 0.0
      %508 = vmatpush1.msra.mxu0 %v183
      %509 = vmatprep.mubr.f32.mxu0 %v432
      %510 = vmatmul.mubr.f32.gmra.mrb[0].mxu0 %v431
      %v511 = vpop.f32.mrb[0].mxu0
      %v512 = vadd.f32 0.0, %v511
      %v513 = vpop.f32.mrb[0].mxu0
      %514 = vmatprep.mubr.f32.mxu0 %v434
      %515 = vmatmul.mubr.f32.gmra.mrb[0].mxu0 %v433
      %v516 = vpop.f32.mrb[0].mxu0
      %v517 = vadd.f32 0.0, %v516
      %v518 = vpop.f32.mrb[0].mxu0
      %519 = vmatprep.mubr.f32.mxu0 %v436
      %520 = vmatmul.mubr.f32.gmra.mrb[0].mxu0 %v435
      %v521 = vpop.f32.mrb[0].mxu0
      %v522 = vadd.f32 0.0, %v521
      %v523 = vpop.f32.mrb[0].mxu0
      %524 = vmatprep.mubr.f32.mxu0 %v438
      %525 = vmatmul.mubr.f32.gmra.mrb[0].mxu0 %v437
      %v526 = vpop.f32.mrb[0].mxu0
      %v527 = vadd.f32 0.0, %v526
      %v528 = vpop.f32.mrb[0].mxu0
      %529 = vmatprep.mubr.f32.mxu0 %v440
      %530 = vmatmul.mubr.f32.gmra.mrb[0].mxu0 %v439
      %v531 = vpop.f32.mrb[0].mxu0
      %v532 = vadd.f32 0.0, %v531
      %v533 = vpop.f32.mrb[0].mxu0
      %534 = vmatprep.mubr.f32.mxu0 %v442
      %535 = vmatmul.mubr.f32.gmra.mrb[0].mxu0 %v441
      %v536 = vpop.f32.mrb[0].mxu0
      %v537 = vadd.f32 0.0, %v536
      %v538 = vpop.f32.mrb[0].mxu0
      %539 = vmatprep.mubr.f32.mxu0 %v444
      %540 = vmatmul.mubr.f32.gmra.mrb[0].mxu0 %v443
      %v541 = vpop.f32.mrb[0].mxu0
      %v542 = vadd.f32 0.0, %v541
      %v543 = vpop.f32.mrb[0].mxu0
      %544 = vdwg.mxu0
      %s545 = scalar_lea.vmem %s150, 112
      %546 = vst.msk [vmem:[%s545] sm:$0xff] %vm298, %v512
      %547 = vst.msk [vmem:[%s545 + $0x8] sm:$0xff] %vm298, %v517
      %548 = vst.msk [vmem:[%s545 + $0x10] sm:$0xff] %vm298, %v522
      %549 = vst.msk [vmem:[%s545 + $0x18] sm:$0xff] %vm298, %v527
      %550 = vst.msk [vmem:[%s545 + $0x20] sm:$0xff] %vm298, %v532
      %551 = vst.msk [vmem:[%s545 + $0x28] sm:$0xff] %vm298, %v537
      %552 = vst.msk [vmem:[%s545 + $0x30] sm:$0x1] %vm305, %v542
      %s553 = scalar_lea.vmem %s143, 336
      %v554 = vld [vmem:[%s553] sm:$0xff]
      %v555 = vld [vmem:[%s553 + $0x8] sm:$0xff]
      %v556 = vld [vmem:[%s553 + $0x10] sm:$0xff]
      %v557 = vld [vmem:[%s553 + $0x18] sm:$0xff]
      %v558 = vld [vmem:[%s553 + $0x20] sm:$0xff]
      %v559 = vld [vmem:[%s553 + $0x28] sm:$0xff]
      %v560 = vld [vmem:[%s553 + $0x30] sm:$0xff]
      %v561 = vld [vmem:[%s553 + $0x38] sm:$0xff]
      %v562 = vld [vmem:[%s553 + $0x40] sm:$0xff]
      %v563 = vld [vmem:[%s553 + $0x48] sm:$0xff]
      %v564 = vld [vmem:[%s553 + $0x50] sm:$0xff]
      %v565 = vld [vmem:[%s553 + $0x58] sm:$0xff]
      %v566 = vld [vmem:[%s553 + $0x60] sm:$0x1]
      %v567 = vld [vmem:[%s553 + $0x68] sm:$0x1]
      %568 = vmatprep.subr.mxu0 0.0
      %569 = vmatpush1.msra.mxu0 %v152
      %570 = vmatprep.subr.mxu0 0.0
      %571 = vmatpush1.msra.mxu0 %v153
      %572 = vmatprep.subr.mxu0 0.0
      %573 = vmatpush1.msra.mxu0 %v154
      %574 = vmatprep.subr.mxu0 0.0
      %575 = vmatpush1.msra.mxu0 %v155
      %576 = vmatprep.subr.mxu0 0.0
      %577 = vmatpush1.msra.mxu0 %v156
      %578 = vmatprep.subr.mxu0 0.0
      %579 = vmatpush1.msra.mxu0 %v157
      %580 = vmatprep.subr.mxu0 0.0
      %581 = vmatpush1.msra.mxu0 %v158
      %582 = vmatprep.subr.mxu0 0.0
      %583 = vmatpush1.msra.mxu0 %v159
      %584 = vmatprep.subr.mxu0 0.0
      %585 = vmatpush1.msra.mxu0 %v160
      %586 = vmatprep.subr.mxu0 0.0
      %587 = vmatpush1.msra.mxu0 %v161
      %588 = vmatprep.subr.mxu0 0.0
      %589 = vmatpush1.msra.mxu0 %v162
      %590 = vmatprep.subr.mxu0 0.0
      %591 = vmatpush1.msra.mxu0 %v163
      %592 = vmatprep.subr.mxu0 0.0
      %593 = vmatpush1.msra.mxu0 %v164
      %594 = vmatprep.subr.mxu0 0.0
      %595 = vmatpush1.msra.mxu0 %v165
      %596 = vmatprep.subr.mxu0 0.0
      %597 = vmatpush1.msra.mxu0 %v166
      %598 = vmatprep.subr.mxu0 0.0
      %599 = vmatpush1.msra.mxu0 %v167
      %600 = vmatprep.subr.mxu0 0.0
      %601 = vmatpush1.msra.mxu0 %v168
      %602 = vmatprep.subr.mxu0 0.0
      %603 = vmatpush1.msra.mxu0 %v169
      %604 = vmatprep.subr.mxu0 0.0
      %605 = vmatpush1.msra.mxu0 %v170
      %606 = vmatprep.subr.mxu0 0.0
      %607 = vmatpush1.msra.mxu0 %v171
      %608 = vmatprep.subr.mxu0 0.0
      %609 = vmatpush1.msra.mxu0 %v172
      %610 = vmatprep.subr.mxu0 0.0
      %611 = vmatpush1.msra.mxu0 %v173
      %612 = vmatprep.subr.mxu0 0.0
      %613 = vmatpush1.msra.mxu0 %v174
      %614 = vmatprep.subr.mxu0 0.0
      %615 = vmatpush1.msra.mxu0 %v175
      %616 = vmatprep.subr.mxu0 0.0
      %617 = vmatpush1.msra.mxu0 %v176
      %618 = vmatprep.subr.mxu0 0.0
      %619 = vmatpush1.msra.mxu0 %v177
      %620 = vmatprep.subr.mxu0 0.0
      %621 = vmatpush1.msra.mxu0 %v178
      %622 = vmatprep.subr.mxu0 0.0
      %623 = vmatpush1.msra.mxu0 %v179
      %624 = vmatprep.subr.mxu0 0.0
      %625 = vmatpush1.msra.mxu0 %v180
      %626 = vmatprep.subr.mxu0 0.0
      %627 = vmatpush1.msra.mxu0 %v181
      %628 = vmatprep.subr.mxu0 0.0
      %629 = vmatpush1.msra.mxu0 %v182
      %630 = vmatprep.subr.mxu0 0.0
      %631 = vmatpush1.msra.mxu0 %v183
      %632 = vmatprep.mubr.f32.mxu0 %v555
      %633 = vmatmul.mubr.f32.gmra.mrb[0].mxu0 %v554
      %v634 = vpop.f32.mrb[0].mxu0
      %v635 = vadd.f32 0.0, %v634
      %v636 = vpop.f32.mrb[0].mxu0
      %637 = vmatprep.mubr.f32.mxu0 %v557
      %638 = vmatmul.mubr.f32.gmra.mrb[0].mxu0 %v556
      %v639 = vpop.f32.mrb[0].mxu0
      %v640 = vadd.f32 0.0, %v639
      %v641 = vpop.f32.mrb[0].mxu0
      %642 = vmatprep.mubr.f32.mxu0 %v559
      %643 = vmatmul.mubr.f32.gmra.mrb[0].mxu0 %v558
      %v644 = vpop.f32.mrb[0].mxu0
      %v645 = vadd.f32 0.0, %v644
      %v646 = vpop.f32.mrb[0].mxu0
      %647 = vmatprep.mubr.f32.mxu0 %v561
      %648 = vmatmul.mubr.f32.gmra.mrb[0].mxu0 %v560
      %v649 = vpop.f32.mrb[0].mxu0
      %v650 = vadd.f32 0.0, %v649
      %v651 = vpop.f32.mrb[0].mxu0
      %652 = vmatprep.mubr.f32.mxu0 %v563
      %653 = vmatmul.mubr.f32.gmra.mrb[0].mxu0 %v562
      %v654 = vpop.f32.mrb[0].mxu0
      %v655 = vadd.f32 0.0, %v654
      %v656 = vpop.f32.mrb[0].mxu0
      %657 = vmatprep.mubr.f32.mxu0 %v565
      %658 = vmatmul.mubr.f32.gmra.mrb[0].mxu0 %v564
      %v659 = vpop.f32.mrb[0].mxu0
      %v660 = vadd.f32 0.0, %v659
      %v661 = vpop.f32.mrb[0].mxu0
      %662 = vmatprep.mubr.f32.mxu0 %v567
      %663 = vmatmul.mubr.f32.gmra.mrb[0].mxu0 %v566
      %v664 = vpop.f32.mrb[0].mxu0
      %v665 = vadd.f32 0.0, %v664
      %v666 = vpop.f32.mrb[0].mxu0
      %667 = vdwg.mxu0
      %s668 = scalar_lea.vmem %s150, 168
      %669 = vst.msk [vmem:[%s668] sm:$0xff] %vm298, %v635
      %670 = vst.msk [vmem:[%s668 + $0x8] sm:$0xff] %vm298, %v640
      %671 = vst.msk [vmem:[%s668 + $0x10] sm:$0xff] %vm298, %v645
      %672 = vst.msk [vmem:[%s668 + $0x18] sm:$0xff] %vm298, %v650
      %673 = vst.msk [vmem:[%s668 + $0x20] sm:$0xff] %vm298, %v655
      %674 = vst.msk [vmem:[%s668 + $0x28] sm:$0xff] %vm298, %v660
      %675 = vst.msk [vmem:[%s668 + $0x30] sm:$0x1] %vm305, %v665
      %s676 = scalar_lea.vmem %s143, 448
      %v677 = vld [vmem:[%s676] sm:$0xff]
      %v678 = vld [vmem:[%s676 + $0x8] sm:$0xff]
      %v679 = vld [vmem:[%s676 + $0x10] sm:$0xff]
      %v680 = vld [vmem:[%s676 + $0x18] sm:$0xff]
      %v681 = vld [vmem:[%s676 + $0x20] sm:$0xff]
      %v682 = vld [vmem:[%s676 + $0x28] sm:$0xff]
      %v683 = vld [vmem:[%s676 + $0x30] sm:$0xff]
      %v684 = vld [vmem:[%s676 + $0x38] sm:$0xff]
      %v685 = vld [vmem:[%s676 + $0x40] sm:$0xff]
      %v686 = vld [vmem:[%s676 + $0x48] sm:$0xff]
      %v687 = vld [vmem:[%s676 + $0x50] sm:$0xff]
      %v688 = vld [vmem:[%s676 + $0x58] sm:$0xff]
      %v689 = vld [vmem:[%s676 + $0x60] sm:$0x1]
      %v690 = vld [vmem:[%s676 + $0x68] sm:$0x1]
      %691 = vmatprep.subr.mxu0 0.0
      %692 = vmatpush1.msra.mxu0 %v152
      %693 = vmatprep.subr.mxu0 0.0
      %694 = vmatpush1.msra.mxu0 %v153
      %695 = vmatprep.subr.mxu0 0.0
      %696 = vmatpush1.msra.mxu0 %v154
      %697 = vmatprep.subr.mxu0 0.0
      %698 = vmatpush1.msra.mxu0 %v155
      %699 = vmatprep.subr.mxu0 0.0
      %700 = vmatpush1.msra.mxu0 %v156
      %701 = vmatprep.subr.mxu0 0.0
      %702 = vmatpush1.msra.mxu0 %v157
      %703 = vmatprep.subr.mxu0 0.0
      %704 = vmatpush1.msra.mxu0 %v158
      %705 = vmatprep.subr.mxu0 0.0
      %706 = vmatpush1.msra.mxu0 %v159
      %707 = vmatprep.subr.mxu0 0.0
      %708 = vmatpush1.msra.mxu0 %v160
      %709 = vmatprep.subr.mxu0 0.0
      %710 = vmatpush1.msra.mxu0 %v161
      %711 = vmatprep.subr.mxu0 0.0
      %712 = vmatpush1.msra.mxu0 %v162
      %713 = vmatprep.subr.mxu0 0.0
      %714 = vmatpush1.msra.mxu0 %v163
      %715 = vmatprep.subr.mxu0 0.0
      %716 = vmatpush1.msra.mxu0 %v164
      %717 = vmatprep.subr.mxu0 0.0
      %718 = vmatpush1.msra.mxu0 %v165
      %719 = vmatprep.subr.mxu0 0.0
      %720 = vmatpush1.msra.mxu0 %v166
      %721 = vmatprep.subr.mxu0 0.0
      %722 = vmatpush1.msra.mxu0 %v167
      %723 = vmatprep.subr.mxu0 0.0
      %724 = vmatpush1.msra.mxu0 %v168
      %725 = vmatprep.subr.mxu0 0.0
      %726 = vmatpush1.msra.mxu0 %v169
      %727 = vmatprep.subr.mxu0 0.0
      %728 = vmatpush1.msra.mxu0 %v170
      %729 = vmatprep.subr.mxu0 0.0
      %730 = vmatpush1.msra.mxu0 %v171
      %731 = vmatprep.subr.mxu0 0.0
      %732 = vmatpush1.msra.mxu0 %v172
      %733 = vmatprep.subr.mxu0 0.0
      %734 = vmatpush1.msra.mxu0 %v173
      %735 = vmatprep.subr.mxu0 0.0
      %736 = vmatpush1.msra.mxu0 %v174
      %737 = vmatprep.subr.mxu0 0.0
      %738 = vmatpush1.msra.mxu0 %v175
      %739 = vmatprep.subr.mxu0 0.0
      %740 = vmatpush1.msra.mxu0 %v176
      %741 = vmatprep.subr.mxu0 0.0
      %742 = vmatpush1.msra.mxu0 %v177
      %743 = vmatprep.subr.mxu0 0.0
      %744 = vmatpush1.msra.mxu0 %v178
      %745 = vmatprep.subr.mxu0 0.0
      %746 = vmatpush1.msra.mxu0 %v179
      %747 = vmatprep.subr.mxu0 0.0
      %748 = vmatpush1.msra.mxu0 %v180
      %749 = vmatprep.subr.mxu0 0.0
      %750 = vmatpush1.msra.mxu0 %v181
      %751 = vmatprep.subr.mxu0 0.0
      %752 = vmatpush1.msra.mxu0 %v182
      %753 = vmatprep.subr.mxu0 0.0
      %754 = vmatpush1.msra.mxu0 %v183
      %755 = vmatprep.mubr.f32.mxu0 %v678
      %756 = vmatmul.mubr.f32.gmra.mrb[0].mxu0 %v677
      %v757 = vpop.f32.mrb[0].mxu0
      %v758 = vadd.f32 0.0, %v757
      %v759 = vpop.f32.mrb[0].mxu0
      %760 = vmatprep.mubr.f32.mxu0 %v680
      %761 = vmatmul.mubr.f32.gmra.mrb[0].mxu0 %v679
      %v762 = vpop.f32.mrb[0].mxu0
      %v763 = vadd.f32 0.0, %v762
      %v764 = vpop.f32.mrb[0].mxu0
      %765 = vmatprep.mubr.f32.mxu0 %v682
      %766 = vmatmul.mubr.f32.gmra.mrb[0].mxu0 %v681
      %v767 = vpop.f32.mrb[0].mxu0
      %v768 = vadd.f32 0.0, %v767
      %v769 = vpop.f32.mrb[0].mxu0
      %770 = vmatprep.mubr.f32.mxu0 %v684
      %771 = vmatmul.mubr.f32.gmra.mrb[0].mxu0 %v683
      %v772 = vpop.f32.mrb[0].mxu0
      %v773 = vadd.f32 0.0, %v772
      %v774 = vpop.f32.mrb[0].mxu0
      %775 = vmatprep.mubr.f32.mxu0 %v686
      %776 = vmatmul.mubr.f32.gmra.mrb[0].mxu0 %v685
      %v777 = vpop.f32.mrb[0].mxu0
      %v778 = vadd.f32 0.0, %v777
      %v779 = vpop.f32.mrb[0].mxu0
      %780 = vmatprep.mubr.f32.mxu0 %v688
      %781 = vmatmul.mubr.f32.gmra.mrb[0].mxu0 %v687
      %v782 = vpop.f32.mrb[0].mxu0
      %v783 = vadd.f32 0.0, %v782
      %v784 = vpop.f32.mrb[0].mxu0
      %785 = vmatprep.mubr.f32.mxu0 %v690
      %786 = vmatmul.mubr.f32.gmra.mrb[0].mxu0 %v689
      %v787 = vpop.f32.mrb[0].mxu0
      %v788 = vadd.f32 0.0, %v787
      %v789 = vpop.f32.mrb[0].mxu0
      %790 = vdwg.mxu0
      %s791 = scalar_lea.vmem %s150, 224
      %792 = vst.msk [vmem:[%s791] sm:$0xff] %vm298, %v758
      %793 = vst.msk [vmem:[%s791 + $0x8] sm:$0xff] %vm298, %v763
      %794 = vst.msk [vmem:[%s791 + $0x10] sm:$0xff] %vm298, %v768
      %795 = vst.msk [vmem:[%s791 + $0x18] sm:$0xff] %vm298, %v773
      %796 = vst.msk [vmem:[%s791 + $0x20] sm:$0xff] %vm298, %v778
      %797 = vst.msk [vmem:[%s791 + $0x28] sm:$0xff] %vm298, %v783
      %798 = vst.msk [vmem:[%s791 + $0x30] sm:$0x1] %vm305, %v788
      %s799 = scalar_lea.vmem %s143, 560
      %v800 = vld [vmem:[%s799] sm:$0xff]
      %v801 = vld [vmem:[%s799 + $0x8] sm:$0xff]
      %v802 = vld [vmem:[%s799 + $0x10] sm:$0xff]
      %v803 = vld [vmem:[%s799 + $0x18] sm:$0xff]
      %v804 = vld [vmem:[%s799 + $0x20] sm:$0xff]
      %v805 = vld [vmem:[%s799 + $0x28] sm:$0xff]
      %v806 = vld [vmem:[%s799 + $0x30] sm:$0xff]
      %v807 = vld [vmem:[%s799 + $0x38] sm:$0xff]
      %v808 = vld [vmem:[%s799 + $0x40] sm:$0xff]
      %v809 = vld [vmem:[%s799 + $0x48] sm:$0xff]
      %v810 = vld [vmem:[%s799 + $0x50] sm:$0xff]
      %v811 = vld [vmem:[%s799 + $0x58] sm:$0xff]
      %v812 = vld [vmem:[%s799 + $0x60] sm:$0x1]
      %v813 = vld [vmem:[%s799 + $0x68] sm:$0x1]
      %814 = vmatprep.subr.mxu0 0.0
      %815 = vmatpush1.msra.mxu0 %v152
      %816 = vmatprep.subr.mxu0 0.0
      %817 = vmatpush1.msra.mxu0 %v153
      %818 = vmatprep.subr.mxu0 0.0
      %819 = vmatpush1.msra.mxu0 %v154
      %820 = vmatprep.subr.mxu0 0.0
      %821 = vmatpush1.msra.mxu0 %v155
      %822 = vmatprep.subr.mxu0 0.0
      %823 = vmatpush1.msra.mxu0 %v156
      %824 = vmatprep.subr.mxu0 0.0
      %825 = vmatpush1.msra.mxu0 %v157
      %826 = vmatprep.subr.mxu0 0.0
      %827 = vmatpush1.msra.mxu0 %v158
      %828 = vmatprep.subr.mxu0 0.0
      %829 = vmatpush1.msra.mxu0 %v159
      %830 = vmatprep.subr.mxu0 0.0
      %831 = vmatpush1.msra.mxu0 %v160
      %832 = vmatprep.subr.mxu0 0.0
      %833 = vmatpush1.msra.mxu0 %v161
      %834 = vmatprep.subr.mxu0 0.0
      %835 = vmatpush1.msra.mxu0 %v162
      %836 = vmatprep.subr.mxu0 0.0
      %837 = vmatpush1.msra.mxu0 %v163
      %838 = vmatprep.subr.mxu0 0.0
      %839 = vmatpush1.msra.mxu0 %v164
      %840 = vmatprep.subr.mxu0 0.0
      %841 = vmatpush1.msra.mxu0 %v165
      %842 = vmatprep.subr.mxu0 0.0
      %843 = vmatpush1.msra.mxu0 %v166
      %844 = vmatprep.subr.mxu0 0.0
      %845 = vmatpush1.msra.mxu0 %v167
      %846 = vmatprep.subr.mxu0 0.0
      %847 = vmatpush1.msra.mxu0 %v168
      %848 = vmatprep.subr.mxu0 0.0
      %849 = vmatpush1.msra.mxu0 %v169
      %850 = vmatprep.subr.mxu0 0.0
      %851 = vmatpush1.msra.mxu0 %v170
      %852 = vmatprep.subr.mxu0 0.0
      %853 = vmatpush1.msra.mxu0 %v171
      %854 = vmatprep.subr.mxu0 0.0
      %855 = vmatpush1.msra.mxu0 %v172
      %856 = vmatprep.subr.mxu0 0.0
      %857 = vmatpush1.msra.mxu0 %v173
      %858 = vmatprep.subr.mxu0 0.0
      %859 = vmatpush1.msra.mxu0 %v174
      %860 = vmatprep.subr.mxu0 0.0
      %861 = vmatpush1.msra.mxu0 %v175
      %862 = vmatprep.subr.mxu0 0.0
      %863 = vmatpush1.msra.mxu0 %v176
      %864 = vmatprep.subr.mxu0 0.0
      %865 = vmatpush1.msra.mxu0 %v177
      %866 = vmatprep.subr.mxu0 0.0
      %867 = vmatpush1.msra.mxu0 %v178
      %868 = vmatprep.subr.mxu0 0.0
      %869 = vmatpush1.msra.mxu0 %v179
      %870 = vmatprep.subr.mxu0 0.0
      %871 = vmatpush1.msra.mxu0 %v180
      %872 = vmatprep.subr.mxu0 0.0
      %873 = vmatpush1.msra.mxu0 %v181
      %874 = vmatprep.subr.mxu0 0.0
      %875 = vmatpush1.msra.mxu0 %v182
      %876 = vmatprep.subr.mxu0 0.0
      %877 = vmatpush1.msra.mxu0 %v183
      %878 = vmatprep.mubr.f32.mxu0 %v801
      %879 = vmatmul.mubr.f32.gmra.mrb[0].mxu0 %v800
      %v880 = vpop.f32.mrb[0].mxu0
      %v881 = vadd.f32 0.0, %v880
      %v882 = vpop.f32.mrb[0].mxu0
      %883 = vmatprep.mubr.f32.mxu0 %v803
      %884 = vmatmul.mubr.f32.gmra.mrb[0].mxu0 %v802
      %v885 = vpop.f32.mrb[0].mxu0
      %v886 = vadd.f32 0.0, %v885
      %v887 = vpop.f32.mrb[0].mxu0
      %888 = vmatprep.mubr.f32.mxu0 %v805
      %889 = vmatmul.mubr.f32.gmra.mrb[0].mxu0 %v804
      %v890 = vpop.f32.mrb[0].mxu0
      %v891 = vadd.f32 0.0, %v890
      %v892 = vpop.f32.mrb[0].mxu0
      %893 = vmatprep.mubr.f32.mxu0 %v807
      %894 = vmatmul.mubr.f32.gmra.mrb[0].mxu0 %v806
      %v895 = vpop.f32.mrb[0].mxu0
      %v896 = vadd.f32 0.0, %v895
      %v897 = vpop.f32.mrb[0].mxu0
      %898 = vmatprep.mubr.f32.mxu0 %v809
      %899 = vmatmul.mubr.f32.gmra.mrb[0].mxu0 %v808
      %v900 = vpop.f32.mrb[0].mxu0
      %v901 = vadd.f32 0.0, %v900
      %v902 = vpop.f32.mrb[0].mxu0
      %903 = vmatprep.mubr.f32.mxu0 %v811
      %904 = vmatmul.mubr.f32.gmra.mrb[0].mxu0 %v810
      %v905 = vpop.f32.mrb[0].mxu0
      %v906 = vadd.f32 0.0, %v905
      %v907 = vpop.f32.mrb[0].mxu0
      %908 = vmatprep.mubr.f32.mxu0 %v813
      %909 = vmatmul.mubr.f32.gmra.mrb[0].mxu0 %v812
      %v910 = vpop.f32.mrb[0].mxu0
      %v911 = vadd.f32 0.0, %v910
      %v912 = vpop.f32.mrb[0].mxu0
      %913 = vdwg.mxu0
      %s914 = scalar_lea.vmem %s150, 280
      %915 = vst.msk [vmem:[%s914] sm:$0xff] %vm298, %v881
      %916 = vst.msk [vmem:[%s914 + $0x8] sm:$0xff] %vm298, %v886
      %917 = vst.msk [vmem:[%s914 + $0x10] sm:$0xff] %vm298, %v891
      %918 = vst.msk [vmem:[%s914 + $0x18] sm:$0xff] %vm298, %v896
      %919 = vst.msk [vmem:[%s914 + $0x20] sm:$0xff] %vm298, %v901
      %920 = vst.msk [vmem:[%s914 + $0x28] sm:$0xff] %vm298, %v906
      %921 = vst.msk [vmem:[%s914 + $0x30] sm:$0x1] %vm305, %v911
      %s922 = scalar_lea.vmem %s143, 672
      %v923 = vld [vmem:[%s922] sm:$0xff]
      %v924 = vld [vmem:[%s922 + $0x8] sm:$0xff]
      %v925 = vld [vmem:[%s922 + $0x10] sm:$0xff]
      %v926 = vld [vmem:[%s922 + $0x18] sm:$0xff]
      %v927 = vld [vmem:[%s922 + $0x20] sm:$0xff]
      %v928 = vld [vmem:[%s922 + $0x28] sm:$0xff]
      %v929 = vld [vmem:[%s922 + $0x30] sm:$0xff]
      %v930 = vld [vmem:[%s922 + $0x38] sm:$0xff]
      %v931 = vld [vmem:[%s922 + $0x40] sm:$0xff]
      %v932 = vld [vmem:[%s922 + $0x48] sm:$0xff]
      %v933 = vld [vmem:[%s922 + $0x50] sm:$0xff]
      %v934 = vld [vmem:[%s922 + $0x58] sm:$0xff]
      %v935 = vld [vmem:[%s922 + $0x60] sm:$0x1]
      %v936 = vld [vmem:[%s922 + $0x68] sm:$0x1]
      %937 = vmatprep.subr.mxu0 0.0
      %938 = vmatpush1.msra.mxu0 %v152
      %939 = vmatprep.subr.mxu0 0.0
      %940 = vmatpush1.msra.mxu0 %v153
      %941 = vmatprep.subr.mxu0 0.0
      %942 = vmatpush1.msra.mxu0 %v154
      %943 = vmatprep.subr.mxu0 0.0
      %944 = vmatpush1.msra.mxu0 %v155
      %945 = vmatprep.subr.mxu0 0.0
      %946 = vmatpush1.msra.mxu0 %v156
      %947 = vmatprep.subr.mxu0 0.0
      %948 = vmatpush1.msra.mxu0 %v157
      %949 = vmatprep.subr.mxu0 0.0
      %950 = vmatpush1.msra.mxu0 %v158
      %951 = vmatprep.subr.mxu0 0.0
      %952 = vmatpush1.msra.mxu0 %v159
      %953 = vmatprep.subr.mxu0 0.0
      %954 = vmatpush1.msra.mxu0 %v160
      %955 = vmatprep.subr.mxu0 0.0
      %956 = vmatpush1.msra.mxu0 %v161
      %957 = vmatprep.subr.mxu0 0.0
      %958 = vmatpush1.msra.mxu0 %v162
      %959 = vmatprep.subr.mxu0 0.0
      %960 = vmatpush1.msra.mxu0 %v163
      %961 = vmatprep.subr.mxu0 0.0
      %962 = vmatpush1.msra.mxu0 %v164
      %963 = vmatprep.subr.mxu0 0.0
      %964 = vmatpush1.msra.mxu0 %v165
      %965 = vmatprep.subr.mxu0 0.0
      %966 = vmatpush1.msra.mxu0 %v166
      %967 = vmatprep.subr.mxu0 0.0
      %968 = vmatpush1.msra.mxu0 %v167
      %969 = vmatprep.subr.mxu0 0.0
      %970 = vmatpush1.msra.mxu0 %v168
      %971 = vmatprep.subr.mxu0 0.0
      %972 = vmatpush1.msra.mxu0 %v169
      %973 = vmatprep.subr.mxu0 0.0
      %974 = vmatpush1.msra.mxu0 %v170
      %975 = vmatprep.subr.mxu0 0.0
      %976 = vmatpush1.msra.mxu0 %v171
      %977 = vmatprep.subr.mxu0 0.0
      %978 = vmatpush1.msra.mxu0 %v172
      %979 = vmatprep.subr.mxu0 0.0
      %980 = vmatpush1.msra.mxu0 %v173
      %981 = vmatprep.subr.mxu0 0.0
      %982 = vmatpush1.msra.mxu0 %v174
      %983 = vmatprep.subr.mxu0 0.0
      %984 = vmatpush1.msra.mxu0 %v175
      %985 = vmatprep.subr.mxu0 0.0
      %986 = vmatpush1.msra.mxu0 %v176
      %987 = vmatprep.subr.mxu0 0.0
      %988 = vmatpush1.msra.mxu0 %v177
      %989 = vmatprep.subr.mxu0 0.0
      %990 = vmatpush1.msra.mxu0 %v178
      %991 = vmatprep.subr.mxu0 0.0
      %992 = vmatpush1.msra.mxu0 %v179
      %993 = vmatprep.subr.mxu0 0.0
      %994 = vmatpush1.msra.mxu0 %v180
      %995 = vmatprep.subr.mxu0 0.0
      %996 = vmatpush1.msra.mxu0 %v181
      %997 = vmatprep.subr.mxu0 0.0
      %998 = vmatpush1.msra.mxu0 %v182
      %999 = vmatprep.subr.mxu0 0.0
      %1000 = vmatpush1.msra.mxu0 %v183
      %1001 = vmatprep.mubr.f32.mxu0 %v924
      %1002 = vmatmul.mubr.f32.gmra.mrb[0].mxu0 %v923
      %v1003 = vpop.f32.mrb[0].mxu0
      %v1004 = vadd.f32 0.0, %v1003
      %v1005 = vpop.f32.mrb[0].mxu0
      %1006 = vmatprep.mubr.f32.mxu0 %v926
      %1007 = vmatmul.mubr.f32.gmra.mrb[0].mxu0 %v925
      %v1008 = vpop.f32.mrb[0].mxu0
      %v1009 = vadd.f32 0.0, %v1008
      %v1010 = vpop.f32.mrb[0].mxu0
      %1011 = vmatprep.mubr.f32.mxu0 %v928
      %1012 = vmatmul.mubr.f32.gmra.mrb[0].mxu0 %v927
      %v1013 = vpop.f32.mrb[0].mxu0
      %v1014 = vadd.f32 0.0, %v1013
      %v1015 = vpop.f32.mrb[0].mxu0
      %1016 = vmatprep.mubr.f32.mxu0 %v930
      %1017 = vmatmul.mubr.f32.gmra.mrb[0].mxu0 %v929
      %v1018 = vpop.f32.mrb[0].mxu0
      %v1019 = vadd.f32 0.0, %v1018
      %v1020 = vpop.f32.mrb[0].mxu0
      %1021 = vmatprep.mubr.f32.mxu0 %v932
      %1022 = vmatmul.mubr.f32.gmra.mrb[0].mxu0 %v931
      %v1023 = vpop.f32.mrb[0].mxu0
      %v1024 = vadd.f32 0.0, %v1023
      %v1025 = vpop.f32.mrb[0].mxu0
      %1026 = vmatprep.mubr.f32.mxu0 %v934
      %1027 = vmatmul.mubr.f32.gmra.mrb[0].mxu0 %v933
      %v1028 = vpop.f32.mrb[0].mxu0
      %v1029 = vadd.f32 0.0, %v1028
      %v1030 = vpop.f32.mrb[0].mxu0
      %1031 = vmatprep.mubr.f32.mxu0 %v936
      %1032 = vmatmul.mubr.f32.gmra.mrb[0].mxu0 %v935
      %v1033 = vpop.f32.mrb[0].mxu0
      %v1034 = vadd.f32 0.0, %v1033
      %v1035 = vpop.f32.mrb[0].mxu0
      %1036 = vdwg.mxu0
      %s1037 = scalar_lea.vmem %s150, 336
      %1038 = vst.msk [vmem:[%s1037] sm:$0xff] %vm298, %v1004
      %1039 = vst.msk [vmem:[%s1037 + $0x8] sm:$0xff] %vm298, %v1009
      %1040 = vst.msk [vmem:[%s1037 + $0x10] sm:$0xff] %vm298, %v1014
      %1041 = vst.msk [vmem:[%s1037 + $0x18] sm:$0xff] %vm298, %v1019
      %1042 = vst.msk [vmem:[%s1037 + $0x20] sm:$0xff] %vm298, %v1024
      %1043 = vst.msk [vmem:[%s1037 + $0x28] sm:$0xff] %vm298, %v1029
      %1044 = vst.msk [vmem:[%s1037 + $0x30] sm:$0x1] %vm305, %v1034
      %s1045 = scalar_lea.vmem %s143, 784
      %v1046 = vld [vmem:[%s1045] sm:$0xff]
      %v1047 = vld [vmem:[%s1045 + $0x8] sm:$0xff]
      %v1048 = vld [vmem:[%s1045 + $0x10] sm:$0xff]
      %v1049 = vld [vmem:[%s1045 + $0x18] sm:$0xff]
      %v1050 = vld [vmem:[%s1045 + $0x20] sm:$0xff]
      %v1051 = vld [vmem:[%s1045 + $0x28] sm:$0xff]
      %v1052 = vld [vmem:[%s1045 + $0x30] sm:$0xff]
      %v1053 = vld [vmem:[%s1045 + $0x38] sm:$0xff]
      %v1054 = vld [vmem:[%s1045 + $0x40] sm:$0xff]
      %v1055 = vld [vmem:[%s1045 + $0x48] sm:$0xff]
      %v1056 = vld [vmem:[%s1045 + $0x50] sm:$0xff]
      %v1057 = vld [vmem:[%s1045 + $0x58] sm:$0xff]
      %v1058 = vld [vmem:[%s1045 + $0x60] sm:$0x1]
      %v1059 = vld [vmem:[%s1045 + $0x68] sm:$0x1]
      %1060 = vmatprep.subr.mxu0 0.0
      %1061 = vmatpush1.msra.mxu0 %v152
      %1062 = vmatprep.subr.mxu0 0.0
      %1063 = vmatpush1.msra.mxu0 %v153
      %1064 = vmatprep.subr.mxu0 0.0
      %1065 = vmatpush1.msra.mxu0 %v154
      %1066 = vmatprep.subr.mxu0 0.0
      %1067 = vmatpush1.msra.mxu0 %v155
      %1068 = vmatprep.subr.mxu0 0.0
      %1069 = vmatpush1.msra.mxu0 %v156
      %1070 = vmatprep.subr.mxu0 0.0
      %1071 = vmatpush1.msra.mxu0 %v157
      %1072 = vmatprep.subr.mxu0 0.0
      %1073 = vmatpush1.msra.mxu0 %v158
      %1074 = vmatprep.subr.mxu0 0.0
      %1075 = vmatpush1.msra.mxu0 %v159
      %1076 = vmatprep.subr.mxu0 0.0
      %1077 = vmatpush1.msra.mxu0 %v160
      %1078 = vmatprep.subr.mxu0 0.0
      %1079 = vmatpush1.msra.mxu0 %v161
      %1080 = vmatprep.subr.mxu0 0.0
      %1081 = vmatpush1.msra.mxu0 %v162
      %1082 = vmatprep.subr.mxu0 0.0
      %1083 = vmatpush1.msra.mxu0 %v163
      %1084 = vmatprep.subr.mxu0 0.0
      %1085 = vmatpush1.msra.mxu0 %v164
      %1086 = vmatprep.subr.mxu0 0.0
      %1087 = vmatpush1.msra.mxu0 %v165
      %1088 = vmatprep.subr.mxu0 0.0
      %1089 = vmatpush1.msra.mxu0 %v166
      %1090 = vmatprep.subr.mxu0 0.0
      %1091 = vmatpush1.msra.mxu0 %v167
      %1092 = vmatprep.subr.mxu0 0.0
      %1093 = vmatpush1.msra.mxu0 %v168
      %1094 = vmatprep.subr.mxu0 0.0
      %1095 = vmatpush1.msra.mxu0 %v169
      %1096 = vmatprep.subr.mxu0 0.0
      %1097 = vmatpush1.msra.mxu0 %v170
      %1098 = vmatprep.subr.mxu0 0.0
      %1099 = vmatpush1.msra.mxu0 %v171
      %1100 = vmatprep.subr.mxu0 0.0
      %1101 = vmatpush1.msra.mxu0 %v172
      %1102 = vmatprep.subr.mxu0 0.0
      %1103 = vmatpush1.msra.mxu0 %v173
      %1104 = vmatprep.subr.mxu0 0.0
      %1105 = vmatpush1.msra.mxu0 %v174
      %1106 = vmatprep.subr.mxu0 0.0
      %1107 = vmatpush1.msra.mxu0 %v175
      %1108 = vmatprep.subr.mxu0 0.0
      %1109 = vmatpush1.msra.mxu0 %v176
      %1110 = vmatprep.subr.mxu0 0.0
      %1111 = vmatpush1.msra.mxu0 %v177
      %1112 = vmatprep.subr.mxu0 0.0
      %1113 = vmatpush1.msra.mxu0 %v178
      %1114 = vmatprep.subr.mxu0 0.0
      %1115 = vmatpush1.msra.mxu0 %v179
      %1116 = vmatprep.subr.mxu0 0.0
      %1117 = vmatpush1.msra.mxu0 %v180
      %1118 = vmatprep.subr.mxu0 0.0
      %1119 = vmatpush1.msra.mxu0 %v181
      %1120 = vmatprep.subr.mxu0 0.0
      %1121 = vmatpush1.msra.mxu0 %v182
      %1122 = vmatprep.subr.mxu0 0.0
      %1123 = vmatpush1.msra.mxu0 %v183
      %1124 = vmatprep.mubr.f32.mxu0 %v1047
      %1125 = vmatmul.mubr.f32.gmra.mrb[0].mxu0 %v1046
      %v1126 = vpop.f32.mrb[0].mxu0
      %v1127 = vadd.f32 0.0, %v1126
      %v1128 = vpop.f32.mrb[0].mxu0
      %1129 = vmatprep.mubr.f32.mxu0 %v1049
      %1130 = vmatmul.mubr.f32.gmra.mrb[0].mxu0 %v1048
      %v1131 = vpop.f32.mrb[0].mxu0
      %v1132 = vadd.f32 0.0, %v1131
      %v1133 = vpop.f32.mrb[0].mxu0
      %1134 = vmatprep.mubr.f32.mxu0 %v1051
      %1135 = vmatmul.mubr.f32.gmra.mrb[0].mxu0 %v1050
      %v1136 = vpop.f32.mrb[0].mxu0
      %v1137 = vadd.f32 0.0, %v1136
      %v1138 = vpop.f32.mrb[0].mxu0
      %1139 = vmatprep.mubr.f32.mxu0 %v1053
      %1140 = vmatmul.mubr.f32.gmra.mrb[0].mxu0 %v1052
      %v1141 = vpop.f32.mrb[0].mxu0
      %v1142 = vadd.f32 0.0, %v1141
      %v1143 = vpop.f32.mrb[0].mxu0
      %1144 = vmatprep.mubr.f32.mxu0 %v1055
      %1145 = vmatmul.mubr.f32.gmra.mrb[0].mxu0 %v1054
      %v1146 = vpop.f32.mrb[0].mxu0
      %v1147 = vadd.f32 0.0, %v1146
      %v1148 = vpop.f32.mrb[0].mxu0
      %1149 = vmatprep.mubr.f32.mxu0 %v1057
      %1150 = vmatmul.mubr.f32.gmra.mrb[0].mxu0 %v1056
      %v1151 = vpop.f32.mrb[0].mxu0
      %v1152 = vadd.f32 0.0, %v1151
      %v1153 = vpop.f32.mrb[0].mxu0
      %1154 = vmatprep.mubr.f32.mxu0 %v1059
      %1155 = vmatmul.mubr.f32.gmra.mrb[0].mxu0 %v1058
      %v1156 = vpop.f32.mrb[0].mxu0
      %v1157 = vadd.f32 0.0, %v1156
      %v1158 = vpop.f32.mrb[0].mxu0
      %1159 = vdwg.mxu0
      %s1160 = scalar_lea.vmem %s150, 392
      %1161 = vst.msk [vmem:[%s1160] sm:$0xff] %vm298, %v1127
      %1162 = vst.msk [vmem:[%s1160 + $0x8] sm:$0xff] %vm298, %v1132
      %1163 = vst.msk [vmem:[%s1160 + $0x10] sm:$0xff] %vm298, %v1137
      %1164 = vst.msk [vmem:[%s1160 + $0x18] sm:$0xff] %vm298, %v1142
      %1165 = vst.msk [vmem:[%s1160 + $0x20] sm:$0xff] %vm298, %v1147
      %1166 = vst.msk [vmem:[%s1160 + $0x28] sm:$0xff] %vm298, %v1152
      %1167 = vst.msk [vmem:[%s1160 + $0x30] sm:$0x1] %vm305, %v1157
      %s1168 = smul.u32 8, %s13
      %p1169 = scmp.lt.s32.totalorder %s1168, 15
      %s1170 = scalar_select %p1169, %s1168, 15
      %s1171 = smul.addr %s1170, 7
      %s1172 = smul.addr %s1171, 8
      %s1173 = scalar_lea.vmem %s2, %s1172
      // Predicated region
      $region29: #{roi_heads_forward.2} parent=27 // pred_check
        %p1174 = pneg %p78
      $region30: #{roi_heads_forward.2} parent=27 // pred_check_branch
        %1176 = sbr.rel (%p1174) target = $region32
      $region31: #{roi_heads_forward.2} parent=27 // pred_region
        %s1177 = smul.u32 8, %s13
      $region32: #{roi_heads_forward.2} parent=27 // pred_fallthru
        _
    $region28: #{roi_heads_forward.2} parent=5 // pred_fallthru
      _
    %p1178 = scmp.le.s32.totalorder 2, %s8
    // Predicated region
    $region33: #{roi_heads_forward.2} parent=5 // pred_check
      %p1179 = pneg %p1178
    $region34: #{roi_heads_forward.2} parent=5 // pred_check_branch
      %1181 = sbr.rel (%p1179) target = $region36
    $region35: #{roi_heads_forward.2} parent=5 // pred_region
      %s1182 = ssub.s32 %s8, 2
      // Predicated region
      $region37: #{roi_heads_forward.2} parent=35 // pred_check
        %p1183 = pneg %p84
      $region38: #{roi_heads_forward.2} parent=35 // pred_check_branch
        %1185 = sbr.rel (%p1183) target = $region40
      $region39: #{roi_heads_forward.2} parent=35 // pred_region
        %s1186 = smul.u32 8, %s14
        %p1187 = scmp.lt.s32.totalorder %s1186, 15
        %s1188 = scalar_select %p1187, %s1186, 15
        %s1189 = smul.addr %s1188, 7
        %s1190 = smul.addr %s1189, 8
        %s1191 = scalar_lea.vmem %s2, %s1190
      $region40: #{roi_heads_forward.2} parent=35 // pred_fallthru
        _
    $region36: #{roi_heads_forward.2} parent=5 // pred_fallthru
      _
  $region6: #{roi_heads_forward.2} parent=0 // loop_footer
    %s12 = sadd.s32 1, %s8
  $region7: #{roi_heads_forward.2} parent=0 // loop_footer_branch
    %7 = sbr.rel target = $region3
  $region8: #{roi_heads_forward.2} parent=0 // loop_exit
    _

// kernel: roi_heads_forward.3
$region0: #{roi_heads_forward.3}
  #allocation0 [shape = 'u32[]', space=smem, size = 0x4, offset = 0x4, fixed_abs, tag = 'smem constant byte address 0x4 - core index']
  #allocation1 [shape = 'u32[144,128]{1,0:T(1,128)}', space=vmem, size = 0x12000, scoped, tag = 'internal scratch']
  %s0 = inlined_call_operand.vmem [shape: f32[16,196], index: 0, kind: input, shape index: {}]
  %s1 = inlined_call_operand.vmem [shape: f32[16,4], index: 1, kind: input, shape index: {}]
  %s2 = inlined_call_operand.vmem [shape: f32[196,32], index: 2, kind: input, shape index: {}]
  %s3 = inlined_call_operand.vmem [shape: f32[1,32], index: 3, kind: input, shape index: {}]
  %s4 = inlined_call_operand.vmem [shape: f32[32,32], index: 4, kind: input, shape index: {}]
  %s5 = inlined_call_operand.vmem [shape: f32[1,32], index: 5, kind: input, shape index: {}]
  %s6 = inlined_call_operand.vmem [shape: f32[32,15], index: 6, kind: input, shape index: {}]
  %s7 = inlined_call_operand.vmem [shape: f32[1,15], index: 7, kind: input, shape index: {}]
  %s8 = inlined_call_operand.vmem [shape: f32[5,16,3], index: 8, kind: output, shape index: {}]
  %s9 = sld [smem:[#allocation0]]
  $region99: #{roi_heads_forward.3} parent=0
    _
  %s11 = ssub.s32 1, %s9
  %s12 = scalar_select 0, %s11, %s9
  $region1: #{roi_heads_forward.3} parent=0
    #allocation2 [shape = 'u8[40960]{0}', space=vmem, size = 0xa000, scoped, tag = 'output window, operand 0']
    loop: start=0, step=1, limit=4
    $region2: #{roi_heads_forward.3} parent=1 // loop_pre_header
      _
    $region3: #{roi_heads_forward.3} parent=1 // loop_header
      %s14 = sphi 0, %s18
      %p15 = scmp.ge.s32.totalorder %s14, 4
      %s24 = sphi 0, %s26
      %s27 = sphi 0, %s24
      %s28 = sphi 0, %s27
      %s44 = sphi 0, %s28
      %s50 = sphi 0, %s52
      %s53 = sphi 0, %s50
      %s54 = sphi 0, %s53
      %s70 = sphi 0, %s54
      %s74 = sphi 0, %s74
      %s76 = sphi 0, %s74
      %s77 = sphi 0, %s76
      %s91 = sphi 0, %s77
      %s95 = sphi 0, %s95
      %s97 = sphi 0, %s95
      %s98 = sphi 0, %s97
      %s112 = sphi 0, %s98
      %s116 = sphi 0, %s116
      %s118 = sphi 0, %s116
      %s119 = sphi 0, %s118
      %s133 = sphi 0, %s119
      %s137 = sphi 0, %s137
      %s139 = sphi 0, %s137
      %s140 = sphi 0, %s139
      %s154 = sphi 0, %s140
      %s158 = sphi 0, %s158
      %s160 = sphi 0, %s158
      %s161 = sphi 0, %s160
      %s175 = sphi 0, %s161
      %s179 = sphi 0, %s179
      %s181 = sphi 0, %s179
      %s182 = sphi 0, %s181
      %s196 = sphi 0, %s182
      %s202 = sphi 0, %s204
      %s205 = sphi 0, %s202
      %s206 = sphi 0, %s205
      %s222 = sphi 0, %s206
    $region4: #{roi_heads_forward.3} parent=1 // loop_header_branch
      %17 = sbr.rel (%p15) target = $region8
    $region5: #{roi_heads_forward.3} parent=1 // loop_body
      %s19 = ssub.s32 %s14, 1
      %s20 = ssub.s32 %s14, 2
      %s21 = sadd.s32 %s14, 1
      %s22 = ssub.s32 %s14, %s21
      %p23 = scmp.eq.s32.totalorder %s22, 0
      %s25 = sadd.s32 %s24, 1
      %s26 = scalar_select %p23, %s24, %s25
      %p29 = pneg %p23
      %p30 = scmp.eq.s32.totalorder %s14, 1
      %p31 = por %p29, %p30
      %p32 = scmp.ne.s32.totalorder %s24, %s27
      %p33 = scmp.eq.s32.totalorder %s14, 0
      %p34 = por %p32, %p33
      %p35 = scmp.ne.s32.totalorder %s24, %s27
      %p36 = scmp.eq.s32.totalorder %s19, 1
      %p37 = por %p35, %p36
      %p38 = scmp.ne.s32.totalorder %s27, %s28
      %p39 = scmp.eq.s32.totalorder %s19, 0
      %p40 = por %p38, %p39
      %p41 = scmp.ne.s32.totalorder %s27, %s28
      %p42 = scmp.eq.s32.totalorder %s20, 1
      %p43 = por %p41, %p42
      %p45 = scmp.ne.s32.totalorder %s28, %s44
      %p46 = scmp.eq.s32.totalorder %s20, 0
      %p47 = por %p45, %p46
      %s48 = ssub.s32 %s14, %s21
      %p49 = scmp.eq.s32.totalorder %s48, 0
      %s51 = sadd.s32 %s50, 1
      %s52 = scalar_select %p49, %s50, %s51
      %p55 = pneg %p49
      %p56 = scmp.eq.s32.totalorder %s14, 1
      %p57 = por %p55, %p56
      %p58 = scmp.ne.s32.totalorder %s50, %s53
      %p59 = scmp.eq.s32.totalorder %s14, 0
      %p60 = por %p58, %p59
      %p61 = scmp.ne.s32.totalorder %s50, %s53
      %p62 = scmp.eq.s32.totalorder %s19, 1
      %p63 = por %p61, %p62
      %p64 = scmp.ne.s32.totalorder %s53, %s54
      %p65 = scmp.eq.s32.totalorder %s19, 0
      %p66 = por %p64, %p65
      %p67 = scmp.ne.s32.totalorder %s53, %s54
      %p68 = scmp.eq.s32.totalorder %s20, 1
      %p69 = por %p67, %p68
      %p71 = scmp.ne.s32.totalorder %s54, %s70
      %p72 = scmp.eq.s32.totalorder %s20, 0
      %p73 = por %p71, %p72
      %s75 = sadd.s32 %s74, 1
      %p78 = scmp.eq.s32.totalorder %s14, 1
      %p79 = scmp.ne.s32.totalorder %s74, %s76
      %p80 = scmp.eq.s32.totalorder %s14, 0
      %p81 = por %p79, %p80
      %p82 = scmp.ne.s32.totalorder %s74, %s76
      %p83 = scmp.eq.s32.totalorder %s19, 1
      %p84 = por %p82, %p83
      %p85 = scmp.ne.s32.totalorder %s76, %s77
      %p86 = scmp.eq.s32.totalorder %s19, 0
      %p87 = por %p85, %p86
      %p88 = scmp.ne.s32.totalorder %s76, %s77
      %p89 = scmp.eq.s32.totalorder %s20, 1
      %p90 = por %p88, %p89
      %p92 = scmp.ne.s32.totalorder %s77, %s91
      %p93 = scmp.eq.s32.totalorder %s20, 0
      %p94 = por %p92, %p93
      %s96 = sadd.s32 %s95, 1
      %p99 = scmp.eq.s32.totalorder %s14, 1
      %p100 = scmp.ne.s32.totalorder %s95, %s97
      %p101 = scmp.eq.s32.totalorder %s14, 0
      %p102 = por %p100, %p101
      %p103 = scmp.ne.s32.totalorder %s95, %s97
      %p104 = scmp.eq.s32.totalorder %s19, 1
      %p105 = por %p103, %p104
      %p106 = scmp.ne.s32.totalorder %s97, %s98
      %p107 = scmp.eq.s32.totalorder %s19, 0
      %p108 = por %p106, %p107
      %p109 = scmp.ne.s32.totalorder %s97, %s98
      %p110 = scmp.eq.s32.totalorder %s20, 1
      %p111 = por %p109, %p110
      %p113 = scmp.ne.s32.totalorder %s98, %s112
      %p114 = scmp.eq.s32.totalorder %s20, 0
      %p115 = por %p113, %p114
      %s117 = sadd.s32 %s116, 1
      %p120 = scmp.eq.s32.totalorder %s14, 1
      %p121 = scmp.ne.s32.totalorder %s116, %s118
      %p122 = scmp.eq.s32.totalorder %s14, 0
      %p123 = por %p121, %p122
      %p124 = scmp.ne.s32.totalorder %s116, %s118
      %p125 = scmp.eq.s32.totalorder %s19, 1
      %p126 = por %p124, %p125
      %p127 = scmp.ne.s32.totalorder %s118, %s119
      %p128 = scmp.eq.s32.totalorder %s19, 0
      %p129 = por %p127, %p128
      %p130 = scmp.ne.s32.totalorder %s118, %s119
      %p131 = scmp.eq.s32.totalorder %s20, 1
      %p132 = por %p130, %p131
      %p134 = scmp.ne.s32.totalorder %s119, %s133
      %p135 = scmp.eq.s32.totalorder %s20, 0
      %p136 = por %p134, %p135
      %s138 = sadd.s32 %s137, 1
      %p141 = scmp.eq.s32.totalorder %s14, 1
      %p142 = scmp.ne.s32.totalorder %s137, %s139
      %p143 = scmp.eq.s32.totalorder %s14, 0
      %p144 = por %p142, %p143
      %p145 = scmp.ne.s32.totalorder %s137, %s139
      %p146 = scmp.eq.s32.totalorder %s19, 1
      %p147 = por %p145, %p146
      %p148 = scmp.ne.s32.totalorder %s139, %s140
      %p149 = scmp.eq.s32.totalorder %s19, 0
      %p150 = por %p148, %p149
      %p151 = scmp.ne.s32.totalorder %s139, %s140
      %p152 = scmp.eq.s32.totalorder %s20, 1
      %p153 = por %p151, %p152
      %p155 = scmp.ne.s32.totalorder %s140, %s154
      %p156 = scmp.eq.s32.totalorder %s20, 0
      %p157 = por %p155, %p156
      %s159 = sadd.s32 %s158, 1
      %p162 = scmp.eq.s32.totalorder %s14, 1
      %p163 = scmp.ne.s32.totalorder %s158, %s160
      %p164 = scmp.eq.s32.totalorder %s14, 0
      %p165 = por %p163, %p164
      %p166 = scmp.ne.s32.totalorder %s158, %s160
      %p167 = scmp.eq.s32.totalorder %s19, 1
      %p168 = por %p166, %p167
      %p169 = scmp.ne.s32.totalorder %s160, %s161
      %p170 = scmp.eq.s32.totalorder %s19, 0
      %p171 = por %p169, %p170
      %p172 = scmp.ne.s32.totalorder %s160, %s161
      %p173 = scmp.eq.s32.totalorder %s20, 1
      %p174 = por %p172, %p173
      %p176 = scmp.ne.s32.totalorder %s161, %s175
      %p177 = scmp.eq.s32.totalorder %s20, 0
      %p178 = por %p176, %p177
      %s180 = sadd.s32 %s179, 1
      %p183 = scmp.eq.s32.totalorder %s14, 1
      %p184 = scmp.ne.s32.totalorder %s179, %s181
      %p185 = scmp.eq.s32.totalorder %s14, 0
      %p186 = por %p184, %p185
      %p187 = scmp.ne.s32.totalorder %s179, %s181
      %p188 = scmp.eq.s32.totalorder %s19, 1
      %p189 = por %p187, %p188
      %p190 = scmp.ne.s32.totalorder %s181, %s182
      %p191 = scmp.eq.s32.totalorder %s19, 0
      %p192 = por %p190, %p191
      %p193 = scmp.ne.s32.totalorder %s181, %s182
      %p194 = scmp.eq.s32.totalorder %s20, 1
      %p195 = por %p193, %p194
      %p197 = scmp.ne.s32.totalorder %s182, %s196
      %p198 = scmp.eq.s32.totalorder %s20, 0
      %p199 = por %p197, %p198
      %s200 = ssub.s32 %s14, %s21
      %p201 = scmp.eq.s32.totalorder %s200, 0
      %s203 = sadd.s32 %s202, 1
      %s204 = scalar_select %p201, %s202, %s203
      %p207 = pneg %p201
      %p208 = scmp.eq.s32.totalorder %s14, 1
      %p209 = por %p207, %p208
      %p210 = scmp.ne.s32.totalorder %s202, %s205
      %p211 = scmp.eq.s32.totalorder %s14, 0
      %p212 = por %p210, %p211
      %p213 = scmp.ne.s32.totalorder %s202, %s205
      %p214 = scmp.eq.s32.totalorder %s19, 1
      %p215 = por %p213, %p214
      %p216 = scmp.ne.s32.totalorder %s205, %s206
      %p217 = scmp.eq.s32.totalorder %s19, 0
      %p218 = por %p216, %p217
      %p219 = scmp.ne.s32.totalorder %s205, %s206
      %p220 = scmp.eq.s32.totalorder %s20, 1
      %p221 = por %p219, %p220
      %p223 = scmp.ne.s32.totalorder %s206, %s222
      %p224 = scmp.eq.s32.totalorder %s20, 0
      %p225 = por %p223, %p224
      %p226 = scmp.le.s32.totalorder 1, %s14
      %p227 = scmp.lt.s32.totalorder %s14, 3
      %p228 = pnand %p226, %p227
      %p229 = pneg %p228
      // Predicated region
      $region9: #{roi_heads_forward.3} parent=5 // pred_check
        _
      $region10: #{roi_heads_forward.3} parent=5 // pred_check_branch
        %231 = sbr.rel (%p228) target = $region12
      $region11: #{roi_heads_forward.3} parent=5 // pred_region
        %s232 = ssub.s32 %s14, 1
        // Predicated region
        $region13: #{roi_heads_forward.3} parent=11 // pred_check
          %p233 = pneg %p87
        $region14: #{roi_heads_forward.3} parent=11 // pred_check_branch
          %235 = sbr.rel (%p233) target = $region16
        $region15: #{roi_heads_forward.3} parent=11 // pred_region
          _
        $region16: #{roi_heads_forward.3} parent=11 // pred_fallthru
          _
        // Predicated region
        $region17: #{roi_heads_forward.3} parent=11 // pred_check
          %p236 = pneg %p108
        $region18: #{roi_heads_forward.3} parent=11 // pred_check_branch
          %238 = sbr.rel (%p236) target = $region20
        $region19: #{roi_heads_forward.3} parent=11 // pred_region
          _
        $region20: #{roi_heads_forward.3} parent=11 // pred_fallthru
          _
        // Predicated region
        $region21: #{roi_heads_forward.3} parent=11 // pred_check
          %p239 = pneg %p129
        $region22: #{roi_heads_forward.3} parent=11 // pred_check_branch
          %241 = sbr.rel (%p239) target = $region24
        $region23: #{roi_heads_forward.3} parent=11 // pred_region
          _
        $region24: #{roi_heads_forward.3} parent=11 // pred_fallthru
          _
        // Predicated region
        $region25: #{roi_heads_forward.3} parent=11 // pred_check
          %p242 = pneg %p150
        $region26: #{roi_heads_forward.3} parent=11 // pred_check_branch
          %244 = sbr.rel (%p242) target = $region28
        $region27: #{roi_heads_forward.3} parent=11 // pred_region
          _
        $region28: #{roi_heads_forward.3} parent=11 // pred_fallthru
          _
        // Predicated region
        $region29: #{roi_heads_forward.3} parent=11 // pred_check
          %p245 = pneg %p171
        $region30: #{roi_heads_forward.3} parent=11 // pred_check_branch
          %247 = sbr.rel (%p245) target = $region32
        $region31: #{roi_heads_forward.3} parent=11 // pred_region
          _
        $region32: #{roi_heads_forward.3} parent=11 // pred_fallthru
          _
        // Predicated region
        $region33: #{roi_heads_forward.3} parent=11 // pred_check
          %p248 = pneg %p192
        $region34: #{roi_heads_forward.3} parent=11 // pred_check_branch
          %250 = sbr.rel (%p248) target = $region36
        $region35: #{roi_heads_forward.3} parent=11 // pred_region
          _
        $region36: #{roi_heads_forward.3} parent=11 // pred_fallthru
          _
      $region12: #{roi_heads_forward.3} parent=5 // pred_fallthru
        _
      %p251 = scmp.lt.s32.totalorder %s14, 2
      // Predicated region
      $region37: #{roi_heads_forward.3} parent=5 // pred_check
        %p252 = pneg %p251
      $region38: #{roi_heads_forward.3} parent=5 // pred_check_branch
        %254 = sbr.rel (%p252) target = $region40
      $region39: #{roi_heads_forward.3} parent=5 // pred_region
        // Predicated region
        $region41: #{roi_heads_forward.3} parent=39 // pred_check
          %p255 = pneg %p34
        $region42: #{roi_heads_forward.3} parent=39 // pred_check_branch
          %257 = sbr.rel (%p255) target = $region44
        $region43: #{roi_heads_forward.3} parent=39 // pred_region
          %p258 = scmp.lt.s32.totalorder %s14, 1
          %s259 = scalar_select %p258, %s14, 1
          %s260 = smul.addr %s259, 2
          %s261 = smul.addr %s260, 8
          %s262 = scalar_lea.vmem %s0, %s261
        $region44: #{roi_heads_forward.3} parent=39 // pred_fallthru
          _
        // Predicated region
        $region45: #{roi_heads_forward.3} parent=39 // pred_check
          %p263 = pneg %p60
        $region46: #{roi_heads_forward.3} parent=39 // pred_check_branch
          %265 = sbr.rel (%p263) target = $region48
        $region47: #{roi_heads_forward.3} parent=39 // pred_region
          %p266 = scmp.lt.s32.totalorder %s14, 1
          %s267 = scalar_select %p266, %s14, 1
          %s268 = smul.addr %s267, 8
          %s269 = scalar_lea.vmem %s1, %s268
        $region48: #{roi_heads_forward.3} parent=39 // pred_fallthru
          _
      $region40: #{roi_heads_forward.3} parent=5 // pred_fallthru
        _
      %p270 = scmp.le.s32.totalorder 1, %s14
      %p271 = scmp.lt.s32.totalorder %s14, 3
      %p272 = pnand %p270, %p271
      %p273 = pneg %p272
      // Predicated region
      $region49: #{roi_heads_forward.3} parent=5 // pred_check
        _
      $region50: #{roi_heads_forward.3} parent=5 // pred_check_branch
        %275 = sbr.rel (%p272) target = $region52
      $region51: #{roi_heads_forward.3} parent=5 // pred_region
        %s276 = ssub.s32 %s14, 1
        %p277 = scmp.lt.s32.totalorder %s19, 1
        %s278 = scalar_select %p277, %s19, 1
        %s279 = smul.addr %s278, 2
        %s280 = smul.addr %s279, 8
        %s281 = scalar_lea.vmem %s0, %s280
        %p282 = pneg %p40
        %p283 = pneg %p37
        %p284 = scmp.lt.s32.totalorder %s19, 1
        %s285 = scalar_select %p284, %s19, 1
        %s286 = smul.addr %s285, 8
        %s287 = scalar_lea.vmem %s1, %s286
        %p288 = pneg %p66
        %p289 = pneg %p63
        %p290 = pneg %p87
        %p291 = pneg %p84
        %p292 = pneg %p108
        %p293 = pneg %p105
        %p294 = pneg %p129
        %p295 = pneg %p126
        %p296 = pneg %p150
        %p297 = pneg %p147
        %p298 = pneg %p171
        %p299 = pneg %p168
        %p300 = pneg %p192
        %p301 = pneg %p189
        %p302 = pneg %p218
        %p303 = pneg %p215
        %s304 = sand.u32 %s205, 1
        %s305 = sand.u32 %s205, 1
        %s306 = smul.addr %s305, 40
        %s307 = scalar_lea.vmem [#allocation2], %s306
        %p308 = scmp.lt.s32.totalorder %s19, 1
        %s309 = scalar_select %p308, %s19, 1
        %s310 = smul.addr %s309, 2
        %s311 = smul.addr %s310, 8
        %s312 = scalar_lea.vmem %s0, %s311
        %p313 = scmp.lt.s32.totalorder %s19, 1
        %s314 = scalar_select %p313, %s19, 1
        %s315 = smul.addr %s314, 8
        %s316 = scalar_lea.vmem %s1, %s315
        %v317 = vld [vmem:[%s312] sm:$0xff]
        %v318 = vld [vmem:[%s312 + $0x8] sm:$0xff]
        %v319 = vld [vmem:[%s2] sm:$0xff]
        %v320 = vld [vmem:[%s2 + $0x8] sm:$0xff]
        %v321 = vld [vmem:[%s2 + $0x10] sm:$0xff]
        %v322 = vld [vmem:[%s2 + $0x18] sm:$0xff]
        %v323 = vld [vmem:[%s2 + $0x20] sm:$0xff]
        %v324 = vld [vmem:[%s2 + $0x28] sm:$0xff]
        %v325 = vld [vmem:[%s2 + $0x30] sm:$0xff]
        %v326 = vld [vmem:[%s2 + $0x38] sm:$0xff]
        %v327 = vld [vmem:[%s2 + $0x40] sm:$0xff]
        %v328 = vld [vmem:[%s2 + $0x48] sm:$0xff]
        %v329 = vld [vmem:[%s2 + $0x50] sm:$0xff]
        %v330 = vld [vmem:[%s2 + $0x58] sm:$0xff]
        %v331 = vld [vmem:[%s2 + $0x60] sm:$0xff]
        %v332 = vld [vmem:[%s2 + $0x68] sm:$0xff]
        %v333 = vld [vmem:[%s2 + $0x70] sm:$0xff]
        %v334 = vld [vmem:[%s2 + $0x78] sm:$0xff]
        %v335 = vld [vmem:[%s2 + $0x80] sm:$0xff]
        %v336 = vld [vmem:[%s2 + $0x88] sm:$0xff]
        %v337 = vld [vmem:[%s2 + $0x90] sm:$0xff]
        %v338 = vld [vmem:[%s2 + $0x98] sm:$0xff]
        %v339 = vld [vmem:[%s2 + $0xa0] sm:$0xff]
        %v340 = vld [vmem:[%s2 + $0xa8] sm:$0xff]
        %v341 = vld [vmem:[%s2 + $0xb0] sm:$0xff]
        %v342 = vld [vmem:[%s2 + $0xb8] sm:$0xff]
        %v343 = vld [vmem:[%s2 + $0xc0] sm:$0xf]
        %v344 = vld [vmem:[%s3] sm:$0x1]
        %v346 = vlaneseq
        %v347 = vshrl.u32 %v346, 7
        %v348 = vsub.s32 0, %v347
        %v349 = vrot.slane %v344, %v348
        %vm351 = vcmask 556032
        %v353 = vsel %vm351, %v318, 0
        %vm355 = vcmask 1043456
        %v357 = vsel %vm355, %v343, 0
        %359 = vmatprep.subr.mxu0 0.0
        %360 = vmatpush1.msra.mxu0 %v319
        %361 = vmatprep.subr.mxu0 0.0
        %362 = vmatpush1.msra.mxu0 %v320
        %363 = vmatprep.subr.mxu0 0.0
        %364 = vmatpush1.msra.mxu0 %v321
        %365 = vmatprep.subr.mxu0 0.0
        %366 = vmatpush1.msra.mxu0 %v322
        %367 = vmatprep.subr.mxu0 0.0
        %368 = vmatpush1.msra.mxu0 %v323
        %369 = vmatprep.subr.mxu0 0.0
        %370 = vmatpush1.msra.mxu0 %v324
        %371 = vmatprep.subr.mxu0 0.0
        %372 = vmatpush1.msra.mxu0 %v325
        %373 = vmatprep.subr.mxu0 0.0
        %374 = vmatpush1.msra.mxu0 %v326
        %375 = vmatprep.subr.mxu0 0.0
        %376 = vmatpush1.msra.mxu0 %v327
        %377 = vmatprep.subr.mxu0 0.0
        %378 = vmatpush1.msra.mxu0 %v328
        %379 = vmatprep.subr.mxu0 0.0
        %380 = vmatpush1.msra.mxu0 %v329
        %381 = vmatprep.subr.mxu0 0.0
        %382 = vmatpush1.msra.mxu0 %v330
        %383 = vmatprep.subr.mxu0 0.0
        %384 = vmatpush1.msra.mxu0 %v331
        %385 = vmatprep.subr.mxu0 0.0
        %386 = vmatpush1.msra.mxu0 %v332
        %387 = vmatprep.subr.mxu0 0.0
        %388 = vmatpush1.msra.mxu0 %v333
        %389 = vmatprep.subr.mxu0 0.0
        %390 = vmatpush1.msra.mxu0 %v334
        %391 = vmatprep.subr.mxu0 0.0
        %392 = vmatpush1.msra.mxu0 %v335
        %393 = vmatprep.subr.mxu0 0.0
        %394 = vmatpush1.msra.mxu0 %v336
        %395 = vmatprep.subr.mxu0 0.0
        %396 = vmatpush1.msra.mxu0 %v337
        %397 = vmatprep.subr.mxu0 0.0
        %398 = vmatpush1.msra.mxu0 %v338
        %399 = vmatprep.subr.mxu0 0.0
        %400 = vmatpush1.msra.mxu0 %v339
        %401 = vmatprep.subr.mxu0 0.0
        %402 = vmatpush1.msra.mxu0 %v340
        %403 = vmatprep.subr.mxu0 0.0
        %404 = vmatpush1.msra.mxu0 %v341
        %405 = vmatprep.subr.mxu0 0.0
        %406 = vmatpush1.msra.mxu0 %v342
        %407 = vmatprep.subr.mxu0 0.0
        %408 = vmatpush1.msra.mxu0 %v357
        %409 = vmatprep.subr.mxu0 0.0
        %410 = vmatpush1.msra.mxu0 0.0
        %411 = vmatprep.subr.mxu0 0.0
        %412 = vmatpush1.msra.mxu0 0.0
        %413 = vmatprep.subr.mxu0 0.0
        %414 = vmatpush1.msra.mxu0 0.0
        %415 = vmatprep.subr.mxu0 0.0
        %416 = vmatpush1.msra.mxu0 0.0
        %417 = vmatprep.subr.mxu0 0.0
        %418 = vmatpush1.msra.mxu0 0.0
        %419 = vmatprep.subr.mxu0 0.0
        %420 = vmatpush1.msra.mxu0 0.0
        %421 = vmatprep.subr.mxu0 0.0
        %422 = vmatpush1.msra.mxu0 0.0
        %423 = vmatprep.mubr.f32.mxu0 %v353
        %424 = vmatmul.mubr.f32.gmra.mrb[0].mxu0 %v317
        %v425 = vpop.f32.mrb[0].mxu0
        %v426 = vadd.f32 %v349, %v425
        %v427 = vpop.f32.mrb[0].mxu0
        %428 = vdwg.mxu0
        %v429 = vmax.f32 %v426, 0.0
        %v430 = vld [vmem:[%s4] sm:$0xff]
        %v431 = vld [vmem:[%s4 + $0x8] sm:$0xff]
        %v432 = vld [vmem:[%s4 + $0x10] sm:$0xff]
        %v433 = vld [vmem:[%s4 + $0x18] sm:$0xff]
        %v434 = vld [vmem:[%s5] sm:$0x1]
        %v436 = vlaneseq
        %v437 = vshrl.u32 %v436, 7
        %v438 = vsub.s32 0, %v437
        %v439 = vrot.slane %v434, %v438
        %vm441 = vcmask 261120
        %v443 = vsel %vm441, %v429, 0
        %445 = vmatprep.subr.mxu0 0.0
        %446 = vmatpush1.msra.mxu0 %v430
        %447 = vmatprep.subr.mxu0 0.0
        %448 = vmatpush1.msra.mxu0 %v431
        %449 = vmatprep.subr.mxu0 0.0
        %450 = vmatpush1.msra.mxu0 %v432
        %451 = vmatprep.subr.mxu0 0.0
        %452 = vmatpush1.msra.mxu0 %v433
        %453 = vmatprep.subr.mxu0 0.0
        %454 = vmatpush1.msra.mxu0 0.0
        %455 = vmatprep.subr.mxu0 0.0
        %456 = vmatpush1.msra.mxu0 0.0
        %457 = vmatprep.subr.mxu0 0.0
        %458 = vmatpush1.msra.mxu0 0.0
        %459 = vmatprep.subr.mxu0 0.0
        %460 = vmatpush1.msra.mxu0 0.0
        %461 = vmatprep.subr.mxu0 0.0
        %462 = vmatpush1.msra.mxu0 0.0
        %463 = vmatprep.subr.mxu0 0.0
        %464 = vmatpush1.msra.mxu0 0.0
        %465 = vmatprep.subr.mxu0 0.0
        %466 = vmatpush1.msra.mxu0 0.0
        %467 = vmatprep.subr.mxu0 0.0
        %468 = vmatpush1.msra.mxu0 0.0
        %469 = vmatprep.subr.mxu0 0.0
        %470 = vmatpush1.msra.mxu0 0.0
        %471 = vmatprep.subr.mxu0 0.0
        %472 = vmatpush1.msra.mxu0 0.0
        %473 = vmatprep.subr.mxu0 0.0
        %474 = vmatpush1.msra.mxu0 0.0
        %475 = vmatprep.subr.mxu0 0.0
        %476 = vmatpush1.msra.mxu0 0.0
        %477 = vmatprep.subr.mxu0 0.0
        %478 = vmatpush1.msra.mxu0 0.0
        %479 = vmatprep.subr.mxu0 0.0
        %480 = vmatpush1.msra.mxu0 0.0
        %481 = vmatprep.subr.mxu0 0.0
        %482 = vmatpush1.msra.mxu0 0.0
        %483 = vmatprep.subr.mxu0 0.0
        %484 = vmatpush1.msra.mxu0 0.0
        %485 = vmatprep.subr.mxu0 0.0
        %486 = vmatpush1.msra.mxu0 0.0
        %487 = vmatprep.subr.mxu0 0.0
        %488 = vmatpush1.msra.mxu0 0.0
        %489 = vmatprep.subr.mxu0 0.0
        %490 = vmatpush1.msra.mxu0 0.0
        %491 = vmatprep.subr.mxu0 0.0
        %492 = vmatpush1.msra.mxu0 0.0
        %493 = vmatprep.subr.mxu0 0.0
        %494 = vmatpush1.msra.mxu0 0.0
        %495 = vmatprep.subr.mxu0 0.0
        %496 = vmatpush1.msra.mxu0 0.0
        %497 = vmatprep.subr.mxu0 0.0
        %498 = vmatpush1.msra.mxu0 0.0
        %499 = vmatprep.subr.mxu0 0.0
        %500 = vmatpush1.msra.mxu0 0.0
        %501 = vmatprep.subr.mxu0 0.0
        %502 = vmatpush1.msra.mxu0 0.0
        %503 = vmatprep.subr.mxu0 0.0
        %504 = vmatpush1.msra.mxu0 0.0
        %505 = vmatprep.subr.mxu0 0.0
        %506 = vmatpush1.msra.mxu0 0.0
        %507 = vmatprep.subr.mxu0 0.0
        %508 = vmatpush1.msra.mxu0 0.0
        %509 = vmatprep.mubr.f32.mxu0 0.0
        %510 = vmatmul.mubr.f32.gmra.mrb[0].mxu0 %v443
        %v511 = vpop.f32.mrb[0].mxu0
        %v512 = vadd.f32 %v439, %v511
        %v513 = vpop.f32.mrb[0].mxu0
        %514 = vdwg.mxu0
        %v515 = vmax.f32 %v512, 0.0
        %v516 = vld [vmem:[%s6] sm:$0xff]
        %v517 = vld [vmem:[%s6 + $0x8] sm:$0xff]
        %v518 = vld [vmem:[%s6 + $0x10] sm:$0xff]
        %v519 = vld [vmem:[%s6 + $0x18] sm:$0xff]
        %v520 = vld [vmem:[%s7] sm:$0x1]
        %v522 = vlaneseq
        %v523 = vshrl.u32 %v522, 7
        %v524 = vsub.s32 0, %v523
        %v525 = vrot.slane %v520, %v524
        %v528 = vsel %vm441, %v515, 0
        %530 = vmatprep.subr.mxu0 0.0
        %531 = vmatpush1.msra.mxu0 %v516
        %532 = vmatprep.subr.mxu0 0.0
        %533 = vmatpush1.msra.mxu0 %v517
        %534 = vmatprep.subr.mxu0 0.0
        %535 = vmatpush1.msra.mxu0 %v518
        %536 = vmatprep.subr.mxu0 0.0
        %537 = vmatpush1.msra.mxu0 %v519
        %538 = vmatprep.subr.mxu0 0.0
        %539 = vmatpush1.msra.mxu0 0.0
        %540 = vmatprep.subr.mxu0 0.0
        %541 = vmatpush1.msra.mxu0 0.0
        %542 = vmatprep.subr.mxu0 0.0
        %543 = vmatpush1.msra.mxu0 0.0
        %544 = vmatprep.subr.mxu0 0.0
        %545 = vmatpush1.msra.mxu0 0.0
        %546 = vmatprep.subr.mxu0 0.0
        %547 = vmatpush1.msra.mxu0 0.0
        %548 = vmatprep.subr.mxu0 0.0
        %549 = vmatpush1.msra.mxu0 0.0
        %550 = vmatprep.subr.mxu0 0.0
        %551 = vmatpush1.msra.mxu0 0.0
        %552 = vmatprep.subr.mxu0 0.0
        %553 = vmatpush1.msra.mxu0 0.0
        %554 = vmatprep.subr.mxu0 0.0
        %555 = vmatpush1.msra.mxu0 0.0
        %556 = vmatprep.subr.mxu0 0.0
        %557 = vmatpush1.msra.mxu0 0.0
        %558 = vmatprep.subr.mxu0 0.0
        %559 = vmatpush1.msra.mxu0 0.0
        %560 = vmatprep.subr.mxu0 0.0
        %561 = vmatpush1.msra.mxu0 0.0
        %562 = vmatprep.subr.mxu0 0.0
        %563 = vmatpush1.msra.mxu0 0.0
        %564 = vmatprep.subr.mxu0 0.0
        %565 = vmatpush1.msra.mxu0 0.0
        %566 = vmatprep.subr.mxu0 0.0
        %567 = vmatpush1.msra.mxu0 0.0
        %568 = vmatprep.subr.mxu0 0.0
        %569 = vmatpush1.msra.mxu0 0.0
        %570 = vmatprep.subr.mxu0 0.0
        %571 = vmatpush1.msra.mxu0 0.0
        %572 = vmatprep.subr.mxu0 0.0
        %573 = vmatpush1.msra.mxu0 0.0
        %574 = vmatprep.subr.mxu0 0.0
        %575 = vmatpush1.msra.mxu0 0.0
        %576 = vmatprep.subr.mxu0 0.0
        %577 = vmatpush1.msra.mxu0 0.0
        %578 = vmatprep.subr.mxu0 0.0
        %579 = vmatpush1.msra.mxu0 0.0
        %580 = vmatprep.subr.mxu0 0.0
        %581 = vmatpush1.msra.mxu0 0.0
        %582 = vmatprep.subr.mxu0 0.0
        %583 = vmatpush1.msra.mxu0 0.0
        %584 = vmatprep.subr.mxu0 0.0
        %585 = vmatpush1.msra.mxu0 0.0
        %586 = vmatprep.subr.mxu0 0.0
        %587 = vmatpush1.msra.mxu0 0.0
        %588 = vmatprep.subr.mxu0 0.0
        %589 = vmatpush1.msra.mxu0 0.0
        %590 = vmatprep.subr.mxu0 0.0
        %591 = vmatpush1.msra.mxu0 0.0
        %592 = vmatprep.subr.mxu0 0.0
        %593 = vmatpush1.msra.mxu0 0.0
        %594 = vmatprep.mubr.f32.mxu0 0.0
        %595 = vmatmul.mubr.f32.gmra.mrb[0].mxu0 %v528
        %v596 = vpop.f32.mrb[0].mxu0
        %v597 = vadd.f32 %v525, %v596
        %v598 = vpop.f32.mrb[0].mxu0
        %599 = vdwg.mxu0
        %vm600 = vcmask 23552
        %v601 = vsel %vm600, %v597, -inf
        %602 = vmax.xlane.f32.xlu0 %v601
        %v603 = vpop.xlane.xlu0 %602
        %v604 = vsub.f32 %v597, %v603
        %v605 = vmul.f32 %v604, 1.442695
        %v606 = vpow.pop %v605
        %v607 = vsel %vm600, %v606, 0.0
        %608 = vadd.xlane.f32.xlu0 %v607
        %v609 = vpop.xlane.xlu0 %608
        %v610 = vrcp.pop %v609
        %v611 = vmul.f32 %v606, %v610
        %v612 = vld [vmem:[%s316] sm:$0xff]
        %614 = vrot.lane.b32.xlu0 %v612, 2
        %v615 = vpop.permute.xlu0 %614
        %v617 = vsub.f32 %v612, %v615
        %v618 = vmul.f32 %v617, 0.5
        %620 = vrot.lane.b32.xlu0 %v618, 126
        %v621 = vpop.permute.xlu0 %620
        %v623 = vadd.f32 %v612, %v621
        %v624 = vrcp.pop 10.0
        %v625 = vmul.f32 %v597, %v624
        %v626 = vrcp.pop 5.0
        %v627 = vmul.f32 %v597, %v626
        %v628 = vmin.f32 %v627, 4.1351666
        %630 = vset.pattern.permute.xlu0 2
        %631 = vperm.xlu0 %630, %v617
        %v632 = vpop.permute.xlu0 %631
        %v634 = vmul.f32 %v625, %v632
        %636 = vset.pattern.permute.xlu0 0
        %637 = vperm.xlu0 %636, %v623
        %v638 = vpop.permute.xlu0 %637
        %v640 = vadd.f32 %v634, %v638
        %641 = vset.pattern.permute.xlu0 3
        %642 = vperm.xlu0 %641, %v617
        %v643 = vpop.permute.xlu0 %642
        %v645 = vmul.f32 %v625, %v643
        %646 = vset.pattern.permute.xlu0 1
        %647 = vperm.xlu0 %646, %v623
        %v648 = vpop.permute.xlu0 %647
        %v650 = vadd.f32 %v645, %v648
        %v651 = vmul.f32 %v628, 1.442695
        %v652 = vpow.pop %v651
        %v653 = vmul.f32 %v652, %v632
        %v654 = vmul.f32 %v652, %v643
        %655 = vst.msk [vmem:[%s307] sm:$0xff] %vm600, %v611
        %v656 = vmul.f32 %v653, 0.5
        %658 = vrot.lane.b32.xlu0 %v656, 122
        %v659 = vpop.permute.xlu0 %658
        %v661 = vsub.f32 %v640, %v659
        %v662 = vmax.f32 %v661, 0.0
        %v663 = vmin.f32 %v662, 16.0
        %665 = vrot.lane.b32.xlu0 %v663, 125
        %v666 = vpop.permute.xlu0 %665
        %s668 = scalar_lea.vmem %s307, 8 [#allocation2]
        %669 = vst.msk [vmem:[%s668] sm:$0xff] %vm600, %v666
        %v670 = vmul.f32 %v654, 0.5
        %672 = vrot.lane.b32.xlu0 %v670, 122
        %v673 = vpop.permute.xlu0 %672
        %v675 = vsub.f32 %v650, %v673
        %v676 = vmax.f32 %v675, 0.0
        %v677 = vmin.f32 %v676, 16.0
        %679 = vrot.lane.b32.xlu0 %v677, 122
        %v680 = vpop.permute.xlu0 %679
        %s682 = scalar_lea.vmem %s307, 16 [#allocation2]
        %683 = vst.msk [vmem:[%s682] sm:$0xff] %vm600, %v680
        %v684 = vadd.f32 %v640, %v659
        %v685 = vmax.f32 %v684, 0.0
        %v686 = vmin.f32 %v685, 16.0
        %688 = vrot.lane.b32.xlu0 %v686, 125
        %v689 = vpop.permute.xlu0 %688
        %s691 = scalar_lea.vmem %s307, 24 [#allocation2]
        %692 = vst.msk [vmem:[%s691] sm:$0xff] %vm600, %v689
        %v693 = vadd.f32 %v650, %v673
        %v694 = vmax.f32 %v693, 0.0
        %v695 = vmin.f32 %v694, 16.0
        %697 = vrot.lane.b32.xlu0 %v695, 122
        %v698 = vpop.permute.xlu0 %697
        %s700 = scalar_lea.vmem %s307, 32 [#allocation2]
        %701 = vst.msk [vmem:[%s700] sm:$0xff] %vm600, %v698
        %s702 = sand.u32 %s205, 1
        %s703 = sand.u32 %s205, 1
        %s704 = smul.addr %s703, 40
        %s705 = scalar_lea.vmem [#allocation2], %s704
        // Predicated region
        $region53: #{roi_heads_forward.3} parent=51 // pred_check
          %p706 = pneg %p215
        $region54: #{roi_heads_forward.3} parent=51 // pred_check_branch
          %708 = sbr.rel (%p706) target = $region56
        $region55: #{roi_heads_forward.3} parent=51 // pred_region
          %s709 = smul.addr %s19, 8
          %s710 = scalar_lea.vmem %s8, %s709
          // Predicated region
          $region57: #{roi_heads_forward.3} parent=55 // pred_check
            _
          $region58: #{roi_heads_forward.3} parent=55 // pred_check_branch
            %712 = sbr.rel (0) target = $region60
          $region59: #{roi_heads_forward.3} parent=55 // pred_region
            // Predicated region
            $region61: #{roi_heads_forward.3} parent=59 // pred_check
              _
            $region62: #{roi_heads_forward.3} parent=59 // pred_check_branch
              %714 = sbr.rel (0) target = $region64
            $region63: #{roi_heads_forward.3} parent=59 // pred_region
              // Predicated region
              $region76: #{roi_heads_forward.3} parent=63 // pred_check
                _
              $region77: #{roi_heads_forward.3} parent=63 // pred_check_branch
                %737 = sbr.rel (0) target = $region79
              $region78: #{roi_heads_forward.3} parent=63 // pred_region
                loop: start=0, step=1, limit=1
                $region80: #{roi_heads_forward.3} parent=78 // loop_pre_header
                  _
                $region81: #{roi_heads_forward.3} parent=78 // loop_header
                  %s739 = sphi 0, %s743
                  %p740 = scmp.ge.s32.totalorder %s739, 1
                  %s744 = sphi %s705, %s705
                  %s745 = sphi %s710, %s710
                $region82: #{roi_heads_forward.3} parent=78 // loop_header_branch
                  %742 = sbr.rel (%p740) target = $region86
                $region83: #{roi_heads_forward.3} parent=78 // loop_body
                  %v746 = vld [vmem:[%s744] sm:$0xff]
                  %747 = vst [vmem:[%s745] sm:$0xff] %v746
                  %v748 = vld [vmem:[%s744 + $0x8] sm:$0xff]
                  %749 = vst [vmem:[%s745 + $0x10] sm:$0xff] %v748
                  %v750 = vld [vmem:[%s744 + $0x10] sm:$0xff]
                  %751 = vst [vmem:[%s745 + $0x20] sm:$0xff] %v750
                  %v752 = vld [vmem:[%s744 + $0x18] sm:$0xff]
                  %753 = vst [vmem:[%s745 + $0x30] sm:$0xff] %v752
                  %v754 = vld [vmem:[%s744 + $0x20] sm:$0xff]
                  %755 = vst [vmem:[%s745 + $0x40] sm:$0xff] %v754
                $region84: #{roi_heads_forward.3} parent=78 // loop_footer
                  %s743 = sadd.s32 1, %s739
                $region85: #{roi_heads_forward.3} parent=78 // loop_footer_branch
                  %738 = sbr.rel target = $region81
                $region86: #{roi_heads_forward.3} parent=78 // loop_exit
                  _
              $region79: #{roi_heads_forward.3} parent=63 // pred_fallthru
                _
              // Predicated region
              $region87: #{roi_heads_forward.3} parent=63 // pred_check
                _
              $region88: #{roi_heads_forward.3} parent=63 // pred_check_branch
                %757 = sbr.rel target = $region90
              $region89: #{roi_heads_forward.3} parent=63 // pred_region
                _
              $region90: #{roi_heads_forward.3} parent=63 // pred_fallthru
                _
            $region64: #{roi_heads_forward.3} parent=59 // pred_fallthru
              _
            // Predicated region
            $region65: #{roi_heads_forward.3} parent=59 // pred_check
              _
            $region66: #{roi_heads_forward.3} parent=59 // pred_check_branch
              %716 = sbr.rel target = $region68
            $region67: #{roi_heads_forward.3} parent=59 // pred_region
              loop: start=0, step=1, limit=1
              $region69: #{roi_heads_forward.3} parent=67 // loop_pre_header
                _
              $region70: #{roi_heads_forward.3} parent=67 // loop_header
                %s719 = sphi 0, %s723
                %p720 = scmp.ge.s32.totalorder %s719, 1
                %s724 = sphi %s705, %s705
                %s725 = sphi %s710, %s710
              $region71: #{roi_heads_forward.3} parent=67 // loop_header_branch
                %722 = sbr.rel (%p720) target = $region75
              $region72: #{roi_heads_forward.3} parent=67 // loop_body
                %v726 = vld [vmem:[%s724] sm:$0xff]
                %727 = vst [vmem:[%s725] sm:$0xff] %v726
                %v728 = vld [vmem:[%s724 + $0x8] sm:$0xff]
                %729 = vst [vmem:[%s725 + $0x10] sm:$0xff] %v728
                %v730 = vld [vmem:[%s724 + $0x10] sm:$0xff]
                %731 = vst [vmem:[%s725 + $0x20] sm:$0xff] %v730
                %v732 = vld [vmem:[%s724 + $0x18] sm:$0xff]
                %733 = vst [vmem:[%s725 + $0x30] sm:$0xff] %v732
                %v734 = vld [vmem:[%s724 + $0x20] sm:$0xff]
                %735 = vst [vmem:[%s725 + $0x40] sm:$0xff] %v734
              $region73: #{roi_heads_forward.3} parent=67 // loop_footer
                %s723 = sadd.s32 1, %s719
              $region74: #{roi_heads_forward.3} parent=67 // loop_footer_branch
                %718 = sbr.rel target = $region70
              $region75: #{roi_heads_forward.3} parent=67 // loop_exit
                _
            $region68: #{roi_heads_forward.3} parent=59 // pred_fallthru
              _
          $region60: #{roi_heads_forward.3} parent=55 // pred_fallthru
            _
          %758 = vnop
        $region56: #{roi_heads_forward.3} parent=51 // pred_fallthru
          _
      $region52: #{roi_heads_forward.3} parent=5 // pred_fallthru
        _
      %p759 = scmp.le.s32.totalorder 2, %s14
      // Predicated region
      $region91: #{roi_heads_forward.3} parent=5 // pred_check
        %p760 = pneg %p759
      $region92: #{roi_heads_forward.3} parent=5 // pred_check_branch
        %762 = sbr.rel (%p760) target = $region94
      $region93: #{roi_heads_forward.3} parent=5 // pred_region
        %s763 = ssub.s32 %s14, 2
        // Predicated region
        $region95: #{roi_heads_forward.3} parent=93 // pred_check
          %p764 = pneg %p221
        $region96: #{roi_heads_forward.3} parent=93 // pred_check_branch
          %766 = sbr.rel (%p764) target = $region98
        $region97: #{roi_heads_forward.3} parent=93 // pred_region
          %s767 = sand.u32 %s206, 1
          %s768 = sand.u32 %s206, 1
          %s769 = smul.addr %s768, 40
          %s770 = scalar_lea.vmem [#allocation2], %s769
        $region98: #{roi_heads_forward.3} parent=93 // pred_fallthru
          _
      $region94: #{roi_heads_forward.3} parent=5 // pred_fallthru
        _
    $region6: #{roi_heads_forward.3} parent=1 // loop_footer
      %s18 = sadd.s32 1, %s14
    $region7: #{roi_heads_forward.3} parent=1 // loop_footer_branch
      %13 = sbr.rel target = $region3
    $region8: #{roi_heads_forward.3} parent=1 // loop_exit
      _

</llo_original>
